<compile_context>
chip_gen: v7x
topology: tpu7x:2x2x1
jax: 0.10.0
libtpu: 0.0.40
codegen_flags: <defaults>
</compile_context>

<pallas_src>
import functools

import jax
import jax.numpy as jnp
import numpy as np
from jax.experimental import pallas as pl
from jax.experimental.pallas import tpu as pltpu


# ----------------------------------------------------------------------------
# Fused kernel. One grid step covers a batch block of `bb` images.
# ----------------------------------------------------------------------------
def _cross_attn_kernel(x_ref, y_ref, gxT_ref, bgx_ref, gyT_ref, bgy_ref,
                       wcT_ref, bc_ref, out_ref, *, split_concat):
    bb, hw, c = x_ref.shape
    inv_hw = jnp.float32(1.0 / hw)
    # Pooling via an MXU ones-row dot (f32 accumulation) -- no f32 widening of
    # the (HW, C) activations. Hoisted out of the batch loop.
    ones_row = jnp.ones((1, hw), jnp.bfloat16)

    for b in range(bb):                               # static unroll (bb is tiny)
        xb = x_ref[b]                                 # (HW, C) bf16
        yb = y_ref[b]                                 # (HW, C) bf16

        # ---- stage 1+2 (folded): pooled mean -> fused conv1x1+fc -> sigmoid ----
        xm = (jnp.dot(ones_row, xb, preferred_element_type=jnp.float32)
              * inv_hw).astype(jnp.bfloat16)          # (1, C)
        ym = (jnp.dot(ones_row, yb, preferred_element_type=jnp.float32)
              * inv_hw).astype(jnp.bfloat16)          # (1, C)
        xs = jax.nn.sigmoid(                          # gates y  (f32, tiny)
            jnp.dot(xm, gxT_ref[...], preferred_element_type=jnp.float32)
            + bgx_ref[...])
        ys = jax.nn.sigmoid(                          # gates x
            jnp.dot(ym, gyT_ref[...], preferred_element_type=jnp.float32)
            + bgy_ref[...])

        # ---- stage 3: bf16 gating + final 1x1 conv with f32 accumulation ----
        xg = xb * ys.astype(jnp.bfloat16)             # x_attention (HW, C) bf16
        yg = yb * xs.astype(jnp.bfloat16)             # y_attention (HW, C) bf16
        if split_concat:
            # v2-v5: 128-deep MXU, K=2C buys nothing -> avoid the concat copy.
            o = (jnp.dot(xg, wcT_ref[:c, :], preferred_element_type=jnp.float32)
                 + jnp.dot(yg, wcT_ref[c:, :], preferred_element_type=jnp.float32)
                 + bc_ref[...])
        else:
            # v6e/v7x: single K=2C contraction fills the 256-deep MXU better.
            lhs = jnp.concatenate([xg, yg], axis=-1)  # (HW, 2C) bf16
            o = (jnp.dot(lhs, wcT_ref[...], preferred_element_type=jnp.float32)
                 + bc_ref[...])
        out_ref[b] = o.astype(out_ref.dtype)


def _tpu_kind():
    try:
        dev = jax.devices()[0]
        return dev.device_kind.lower() if dev.platform == "tpu" else ""
    except Exception:
        return ""


def cross_attention(x, y, params, out_dtype=jnp.float32):
    """x, y: (B, H, W, C) float32 (NHWC). Returns (B, H, W, C) `out_dtype`."""
    B, H, W, C = x.shape
    HW = H * W

    # bf16 activation streams: halves the dominant HBM read bytes.
    xf = x.reshape(B, HW, C).astype(jnp.bfloat16)
    yf = y.reshape(B, HW, C).astype(jnp.bfloat16)

    # Fold conv1x1_{x,y} + fc_{x,y} into one bf16 matrix + f32 bias each (exact:
    # both are linear and the mean-pool commutes through them).
    gxT = (params['wfx'] @ params['wx']).T.astype(jnp.bfloat16)              # (C, C)
    gyT = (params['wfy'] @ params['wy']).T.astype(jnp.bfloat16)              # (C, C)
    bgx = (params['bx'] @ params['wfx'].T + params['bfx']).astype(jnp.float32)  # (1, C)
    bgy = (params['by'] @ params['wfy'].T + params['bfy']).astype(jnp.float32)  # (1, C)
    wcT = params['wc'].T.astype(jnp.bfloat16)       # (2C, C): rows 0:C act on x*y_sig
    bc = params['bc'].astype(jnp.float32)           # (1, C)

    kind = _tpu_kind()
    # 128-deep MXUs (v2-v5): skip the channel concat (pure VMEM copy there).
    split_concat = any(t in kind for t in ("v2", "v3", "v4", "v5"))
    # Single-TC chips (v5e/v6e): collapse batch to one grid step (no per-step
    # overhead); multi-TC chips (v4/v5p megacore, v7x) keep grid=(B,) parallel.
    single_tc = ("lite" in kind) or ("v5e" in kind) or ("v6e" in kind)

    out_isize = jnp.dtype(out_dtype).itemsize

    def vmem_estimate(bb):
        acts = 2 * (2 * bb * HW * C * 2)            # double-buffered bf16 x, y
        outs = 2 * (bb * HW * C * out_isize)        # double-buffered output
        temps = bb * HW * C * (2 + 2 + 4)           # gated bf16 pair + f32 result
        if not split_concat:
            temps += bb * HW * (2 * C) * 2          # (HW, 2C) bf16 concat
        weights = (2 * C * C + 2 * C * C) * 2 + 3 * C * 4
        return acts + outs + temps + weights

    budget = 48 * 1024 * 1024                       # conservative (v7x VMEM = 64 MiB)
    bb = B if (single_tc and vmem_estimate(B) <= budget) else 1
    assert vmem_estimate(bb) <= budget, (
        "whole-image block exceeds VMEM budget; "
        "TODO(synk): add an HW-tiled stage-3 pipeline for large resolutions")

    act_spec = pl.BlockSpec((bb, HW, C), lambda b: (b, 0, 0))
    cc_spec = pl.BlockSpec((C, C), lambda b: (0, 0))
    bias_spec = pl.BlockSpec((1, C), lambda b: (0, 0))
    wc_spec = pl.BlockSpec((2 * C, C), lambda b: (0, 0))

    vmem_limit = int(min(max(2 * vmem_estimate(bb), 32 * 1024 * 1024),
                         64 * 1024 * 1024))

    out = pl.pallas_call(
        functools.partial(_cross_attn_kernel, split_concat=split_concat),
        grid=(B // bb,),
        in_specs=[act_spec, act_spec,
                  cc_spec, bias_spec, cc_spec, bias_spec,
                  wc_spec, bias_spec],
        out_specs=act_spec,
        out_shape=jax.ShapeDtypeStruct((B, HW, C), out_dtype),
        compiler_params=pltpu.CompilerParams(
            dimension_semantics=("parallel",),
            vmem_limit_bytes=vmem_limit),
    )(xf, yf, gxT, bgx, gyT, bgy, wcT, bc)

    return out.reshape(B, H, W, C)


# ----------------------------------------------------------------------------
# Pure-JAX reference (mirrors the PyTorch forward exactly) for verification.
# ----------------------------------------------------------------------------
def reference(x, y, params):
    B, H, W, C = x.shape
    xf = x.reshape(B, -1, C)
    yf = y.reshape(B, -1, C)
    xc = jnp.einsum('bpc,oc->bpo', xf, params['wx']) + params['bx']
    yc = jnp.einsum('bpc,oc->bpo', yf, params['wy']) + params['by']
    xp = xc.mean(axis=1)                       # adaptive_avg_pool2d -> (B, C)
    yp = yc.mean(axis=1)
    xs = jax.nn.sigmoid(xp @ params['wfx'].T + params['bfx'][0])
    ys = jax.nn.sigmoid(yp @ params['wfy'].T + params['bfy'][0])
    xa = xf * ys[:, None, :]
    ya = yf * xs[:, None, :]
    cat = jnp.concatenate([xa, ya], axis=-1)   # (B, HW, 2C)
    out = jnp.einsum('bpc,oc->bpo', cat, params['wc']) + params['bc']
    return out.reshape(B, H, W, C)


def make_params(key, C):
    ks = jax.random.split(key, 10)
    norm = lambda k, s, scale: (scale * jax.random.normal(k, s)).astype(jnp.float32)
    return {
        # conv1x1_x / conv1x1_y: weight (C_out, C_in) (1x1 kernel squeezed), bias (1, C)
        'wx': norm(ks[0], (C, C), 0.1), 'bx': norm(ks[1], (1, C), 0.01),
        'wy': norm(ks[2], (C, C), 0.1), 'by': norm(ks[3], (1, C), 0.01),
        # fc_x / fc_y: Linear weight (C_out, C_in), bias (1, C)
        'wfx': norm(ks[4], (C, C), 0.1), 'bfx': norm(ks[5], (1, C), 0.01),
        'wfy': norm(ks[6], (C, C), 0.1), 'bfy': norm(ks[7], (1, C), 0.01),
        # conv1x1_concat: weight (C_out, 2*C_in), bias (1, C)
        'wc': norm(ks[8], (C, 2 * C), 0.1), 'bc': norm(ks[9], (1, C), 0.01),
    }


if __name__ == "__main__":
    # Small, lane-aligned shapes consistent with the module (PyTorch NCHW
    # (2, 128, 16, 16), carried here as NHWC).
    B, C, H, W = 2, 128, 16, 16
    key = jax.random.PRNGKey(0)
    kx, ky, kp = jax.random.split(key, 3)
    x = jax.random.normal(kx, (B, H, W, C), dtype=jnp.float32)
    y = jax.random.normal(ky, (B, H, W, C), dtype=jnp.float32)
    params = make_params(kp, C)

    out = jax.block_until_ready(cross_attention(x, y, params))
    ref = jax.block_until_ready(reference(x, y, params))

    assert out.shape == (B, H, W, C)
    np.testing.assert_allclose(np.asarray(out), np.asarray(ref),
                               rtol=5e-2, atol=5e-2)
    print("KERNEL_OK")
</pallas_src>

<mosaic_0001>
module attributes {stable_mosaic.version = 11 : i64} {
  func.func @_cross_attn_kernel(%arg0: i32, %arg1: memref<1x256x128xbf16, #tpu.memory_space<vmem>>, %arg2: memref<1x256x128xbf16, #tpu.memory_space<vmem>>, %arg3: memref<128x128xbf16, #tpu.memory_space<vmem>>, %arg4: memref<1x128xf32, #tpu.memory_space<vmem>>, %arg5: memref<128x128xbf16, #tpu.memory_space<vmem>>, %arg6: memref<1x128xf32, #tpu.memory_space<vmem>>, %arg7: memref<256x128xbf16, #tpu.memory_space<vmem>>, %arg8: memref<1x128xf32, #tpu.memory_space<vmem>>, %arg9: memref<1x256x128xf32, #tpu.memory_space<vmem>>) attributes {dimension_semantics = [#tpu.dimension_semantics<parallel>], iteration_bounds = array<i64: 2>, scalar_prefetch = 0 : i64, scratch_operands = 0 : i64, tpu.core_type = #tpu.core_type<tc>, window_params = [{transform_indices = @transform_0, window_bounds = array<i64: 1, 256, 128>}, {transform_indices = @transform_1, window_bounds = array<i64: 1, 256, 128>}, {pipeline_mode = #tpu.pipeline_mode<synchronous>, transform_indices = @transform_2, window_bounds = array<i64: 128, 128>}, {pipeline_mode = #tpu.pipeline_mode<synchronous>, transform_indices = @transform_3, window_bounds = array<i64: 1, 128>}, {pipeline_mode = #tpu.pipeline_mode<synchronous>, transform_indices = @transform_4, window_bounds = array<i64: 128, 128>}, {pipeline_mode = #tpu.pipeline_mode<synchronous>, transform_indices = @transform_5, window_bounds = array<i64: 1, 128>}, {pipeline_mode = #tpu.pipeline_mode<synchronous>, transform_indices = @transform_6, window_bounds = array<i64: 256, 128>}, {pipeline_mode = #tpu.pipeline_mode<synchronous>, transform_indices = @transform_7, window_bounds = array<i64: 1, 128>}, {transform_indices = @transform_8, window_bounds = array<i64: 1, 256, 128>}]} {
    %cst = arith.constant 1.000000e+00 : bf16
    %0 = vector.broadcast %cst : bf16 to vector<1x256xbf16>
    %c0 = arith.constant 0 : index
    %c0_0 = arith.constant 0 : index
    %c0_1 = arith.constant 0 : index
    %1 = vector.load %arg1[%c0, %c0_0, %c0_1] : memref<1x256x128xbf16, #tpu.memory_space<vmem>>, vector<1x256x128xbf16>
    %2 = vector.shape_cast %1 : vector<1x256x128xbf16> to vector<256x128xbf16>
    %c0_2 = arith.constant 0 : index
    %c0_3 = arith.constant 0 : index
    %c0_4 = arith.constant 0 : index
    %3 = vector.load %arg2[%c0_2, %c0_3, %c0_4] : memref<1x256x128xbf16, #tpu.memory_space<vmem>>, vector<1x256x128xbf16>
    %4 = vector.shape_cast %3 : vector<1x256x128xbf16> to vector<256x128xbf16>
    %cst_5 = arith.constant dense<0.000000e+00> : vector<1x128xf32>
    %5 = tpu.matmul %0, %2, %cst_5 {dimension_numbers = #tpu.dot_dimension_numbers<[1], [0], [0], [1], [0, 0, 1, 1], [], []>} : vector<1x256xbf16>, vector<256x128xbf16>, vector<1x128xf32> -> vector<1x128xf32>
    %cst_6 = arith.constant 3.906250e-03 : f32
    %6 = vector.broadcast %cst_6 : f32 to vector<1x128xf32>
    %7 = arith.mulf %5, %6 : vector<1x128xf32>
    %8 = arith.truncf %7 : vector<1x128xf32> to vector<1x128xbf16>
    %cst_7 = arith.constant dense<0.000000e+00> : vector<1x128xf32>
    %9 = tpu.matmul %0, %4, %cst_7 {dimension_numbers = #tpu.dot_dimension_numbers<[1], [0], [0], [1], [0, 0, 1, 1], [], []>} : vector<1x256xbf16>, vector<256x128xbf16>, vector<1x128xf32> -> vector<1x128xf32>
    %cst_8 = arith.constant 3.906250e-03 : f32
    %10 = vector.broadcast %cst_8 : f32 to vector<1x128xf32>
    %11 = arith.mulf %9, %10 : vector<1x128xf32>
    %12 = arith.truncf %11 : vector<1x128xf32> to vector<1x128xbf16>
    %c0_9 = arith.constant 0 : index
    %c0_10 = arith.constant 0 : index
    %13 = vector.load %arg3[%c0_9, %c0_10] : memref<128x128xbf16, #tpu.memory_space<vmem>>, vector<128x128xbf16>
    %cst_11 = arith.constant dense<0.000000e+00> : vector<1x128xf32>
    %14 = tpu.matmul %8, %13, %cst_11 {dimension_numbers = #tpu.dot_dimension_numbers<[1], [0], [0], [1], [0, 0, 1, 1], [], []>} : vector<1x128xbf16>, vector<128x128xbf16>, vector<1x128xf32> -> vector<1x128xf32>
    %c0_12 = arith.constant 0 : index
    %c0_13 = arith.constant 0 : index
    %15 = vector.load %arg4[%c0_12, %c0_13] : memref<1x128xf32, #tpu.memory_space<vmem>>, vector<1x128xf32>
    %16 = arith.addf %14, %15 : vector<1x128xf32>
    %17 = arith.negf %16 : vector<1x128xf32>
    %18 = math.exp %17 : vector<1x128xf32>
    %cst_14 = arith.constant 1.000000e+00 : f32
    %19 = vector.broadcast %cst_14 : f32 to vector<1x128xf32>
    %20 = arith.addf %19, %18 : vector<1x128xf32>
    %21 = arith.divf %19, %20 : vector<1x128xf32>
    %c0_15 = arith.constant 0 : index
    %c0_16 = arith.constant 0 : index
    %22 = vector.load %arg5[%c0_15, %c0_16] : memref<128x128xbf16, #tpu.memory_space<vmem>>, vector<128x128xbf16>
    %cst_17 = arith.constant dense<0.000000e+00> : vector<1x128xf32>
    %23 = tpu.matmul %12, %22, %cst_17 {dimension_numbers = #tpu.dot_dimension_numbers<[1], [0], [0], [1], [0, 0, 1, 1], [], []>} : vector<1x128xbf16>, vector<128x128xbf16>, vector<1x128xf32> -> vector<1x128xf32>
    %c0_18 = arith.constant 0 : index
    %c0_19 = arith.constant 0 : index
    %24 = vector.load %arg6[%c0_18, %c0_19] : memref<1x128xf32, #tpu.memory_space<vmem>>, vector<1x128xf32>
    %25 = arith.addf %23, %24 : vector<1x128xf32>
    %26 = arith.negf %25 : vector<1x128xf32>
    %27 = math.exp %26 : vector<1x128xf32>
    %cst_20 = arith.constant 1.000000e+00 : f32
    %28 = vector.broadcast %cst_20 : f32 to vector<1x128xf32>
    %29 = arith.addf %28, %27 : vector<1x128xf32>
    %30 = arith.divf %28, %29 : vector<1x128xf32>
    %31 = arith.truncf %30 : vector<1x128xf32> to vector<1x128xbf16>
    %32 = vector.broadcast %31 : vector<1x128xbf16> to vector<256x128xbf16>
    %33 = arith.mulf %2, %32 : vector<256x128xbf16>
    %34 = arith.truncf %21 : vector<1x128xf32> to vector<1x128xbf16>
    %35 = vector.broadcast %34 : vector<1x128xbf16> to vector<256x128xbf16>
    %36 = arith.mulf %4, %35 : vector<256x128xbf16>
    %37 = tpu.concatenate %33, %36 in 1 : vector<256x128xbf16>, vector<256x128xbf16> -> vector<256x256xbf16>
    %c0_21 = arith.constant 0 : index
    %c0_22 = arith.constant 0 : index
    %38 = vector.load %arg7[%c0_21, %c0_22] : memref<256x128xbf16, #tpu.memory_space<vmem>>, vector<256x128xbf16>
    %cst_23 = arith.constant dense<0.000000e+00> : vector<256x128xf32>
    %39 = tpu.matmul %37, %38, %cst_23 {dimension_numbers = #tpu.dot_dimension_numbers<[1], [0], [0], [1], [0, 0, 1, 1], [], []>} : vector<256x256xbf16>, vector<256x128xbf16>, vector<256x128xf32> -> vector<256x128xf32>
    %c0_24 = arith.constant 0 : index
    %c0_25 = arith.constant 0 : index
    %40 = vector.load %arg8[%c0_24, %c0_25] : memref<1x128xf32, #tpu.memory_space<vmem>>, vector<1x128xf32>
    %41 = vector.broadcast %40 : vector<1x128xf32> to vector<256x128xf32>
    %42 = arith.addf %39, %41 : vector<256x128xf32>
    %c0_26 = arith.constant 0 : index
    %c0_27 = arith.constant 0 : index
    %c0_28 = arith.constant 0 : index
    %43 = vector.load %arg9[%c0_26, %c0_27, %c0_28] : memref<1x256x128xf32, #tpu.memory_space<vmem>>, vector<1x256x128xf32>
    %44 = vector.shape_cast %43 : vector<1x256x128xf32> to vector<256x128xf32>
    %45 = vector.shape_cast %42 : vector<256x128xf32> to vector<1x256x128xf32>
    tpu.vector_store %arg9[%c0_26, %c0_27, %c0_28], %45 {strides = array<i32>} : memref<1x256x128xf32, #tpu.memory_space<vmem>>, vector<1x256x128xf32>,
    return
  }
  func.func @transform_0(%arg0: i32) -> (i32, i32, i32) {
    %c0_i32 = arith.constant 0 : i32
    %c0_i32_0 = arith.constant 0 : i32
    %c0_i32_1 = arith.constant 0 : i32
    return %arg0, %c0_i32, %c0_i32_0 : i32, i32, i32
  }
  func.func @transform_1(%arg0: i32) -> (i32, i32, i32) {
    %c0_i32 = arith.constant 0 : i32
    %c0_i32_0 = arith.constant 0 : i32
    %c0_i32_1 = arith.constant 0 : i32
    return %arg0, %c0_i32, %c0_i32_0 : i32, i32, i32
  }
  func.func @transform_2(%arg0: i32) -> (i32, i32) {
    %c0_i32 = arith.constant 0 : i32
    %c0_i32_0 = arith.constant 0 : i32
    %c0_i32_1 = arith.constant 0 : i32
    return %c0_i32, %c0_i32_0 : i32, i32
  }
  func.func @transform_3(%arg0: i32) -> (i32, i32) {
    %c0_i32 = arith.constant 0 : i32
    %c0_i32_0 = arith.constant 0 : i32
    %c0_i32_1 = arith.constant 0 : i32
    return %c0_i32, %c0_i32_0 : i32, i32
  }
  func.func @transform_4(%arg0: i32) -> (i32, i32) {
    %c0_i32 = arith.constant 0 : i32
    %c0_i32_0 = arith.constant 0 : i32
    %c0_i32_1 = arith.constant 0 : i32
    return %c0_i32, %c0_i32_0 : i32, i32
  }
  func.func @transform_5(%arg0: i32) -> (i32, i32) {
    %c0_i32 = arith.constant 0 : i32
    %c0_i32_0 = arith.constant 0 : i32
    %c0_i32_1 = arith.constant 0 : i32
    return %c0_i32, %c0_i32_0 : i32, i32
  }
  func.func @transform_6(%arg0: i32) -> (i32, i32) {
    %c0_i32 = arith.constant 0 : i32
    %c0_i32_0 = arith.constant 0 : i32
    %c0_i32_1 = arith.constant 0 : i32
    return %c0_i32, %c0_i32_0 : i32, i32
  }
  func.func @transform_7(%arg0: i32) -> (i32, i32) {
    %c0_i32 = arith.constant 0 : i32
    %c0_i32_0 = arith.constant 0 : i32
    %c0_i32_1 = arith.constant 0 : i32
    return %c0_i32, %c0_i32_0 : i32, i32
  }
  func.func @transform_8(%arg0: i32) -> (i32, i32, i32) {
    %c0_i32 = arith.constant 0 : i32
    %c0_i32_0 = arith.constant 0 : i32
    %c0_i32_1 = arith.constant 0 : i32
    return %arg0, %c0_i32, %c0_i32_0 : i32, i32, i32
  }
}

</mosaic_0001>

<llo_original>
// kernel: tpu_custom_call.1
$region0: #{tpu_custom_call.1}
  #allocation0 [shape = 'u32[]', space=smem, size = 0x4, offset = 0x4, fixed_abs, tag = 'smem constant byte address 0x4 - core index']
  #allocation1 [shape = 'u32[144,128]{1,0:T(1,128)}', space=vmem, size = 0x12000, scoped, tag = 'internal scratch']
  %s0 = inlined_call_operand.hbm [shape: bf16[2,256,128], index: 0, kind: input, shape index: {}]
  %s1 = inlined_call_operand.hbm [shape: bf16[2,256,128], index: 1, kind: input, shape index: {}]
  %s2 = inlined_call_operand.hbm [shape: bf16[128,128], index: 2, kind: input, shape index: {}]
  %s3 = inlined_call_operand.vmem [shape: f32[1,128], index: 3, kind: input, shape index: {}]
  %s4 = inlined_call_operand.hbm [shape: bf16[128,128], index: 4, kind: input, shape index: {}]
  %s5 = inlined_call_operand.vmem [shape: f32[1,128], index: 5, kind: input, shape index: {}]
  %s6 = inlined_call_operand.hbm [shape: bf16[256,128], index: 6, kind: input, shape index: {}]
  %s7 = inlined_call_operand.vmem [shape: f32[1,128], index: 7, kind: input, shape index: {}]
  %s8 = inlined_call_operand.hbm [shape: f32[2,256,128], index: 8, kind: output, shape index: {}]
  %s9 = sld [smem:[#allocation0]]
  $region85: #{tpu_custom_call.1} parent=0
    _
  %s11 = ssub.s32 1, %s9
  %s12 = scalar_select 0, %s11, %s9
  $region1: #{tpu_custom_call.1} parent=0
    #allocation2 [shape = 'u8[131072]{0}', space=vmem, size = 0x20000, scoped, tag = 'input window, operand 0']
    #allocation3 [shape = 's32[2]{0}', space=sflag, size = 0x8, scoped, tag = 'scoped memory for tpu_custom_call.1']
    #allocation4 [shape = 's32[2]{0}', space=sflag, size = 0x8, scoped, tag = 'scoped memory for tpu_custom_call.1']
    #allocation5 [shape = 'u8[131072]{0}', space=vmem, size = 0x20000, scoped, tag = 'input window, operand 1']
    #allocation6 [shape = 's32[2]{0}', space=sflag, size = 0x8, scoped, tag = 'scoped memory for tpu_custom_call.1']
    #allocation7 [shape = 'u8[32768]{0}', space=vmem, size = 0x8000, scoped, tag = 'input window, operand 2, single buffered']
    #allocation8 [shape = 'u8[32768]{0}', space=vmem, size = 0x8000, scoped, tag = 'input window, operand 4, single buffered']
    #allocation9 [shape = 's32[1]{0}', space=sflag, size = 0x4, scoped, tag = 'scoped memory for tpu_custom_call.1']
    #allocation10 [shape = 'u8[65536]{0}', space=vmem, size = 0x10000, scoped, tag = 'input window, operand 6, single buffered']
    #allocation11 [shape = 'u8[262144]{0}', space=vmem, size = 0x40000, scoped, tag = 'output window, operand 0']
    %13 = vsyncpa [#allocation3], 0
    %s14 = scalar_lea.sflag [#allocation3], 1
    %15 = vsyncpa %s14, 0
    %16 = vsyncpa [#allocation6], 0
    %s17 = scalar_lea.sflag [#allocation6], 1
    %18 = vsyncpa %s17, 0
    %19 = vsyncpa [#allocation9], 0
    %20 = vsyncpa [#allocation4], 0
    %s21 = scalar_lea.sflag [#allocation4], 1
    %22 = vsyncpa %s21, 0
    loop: start=0, step=1, limit=4
    $region2: #{tpu_custom_call.1} parent=1 // loop_pre_header
      _
    $region3: #{tpu_custom_call.1} parent=1 // loop_header
      %s24 = sphi 0, %s28
      %p25 = scmp.ge.s32.totalorder %s24, 4
      %s34 = sphi 0, %s36
      %s37 = sphi 0, %s34
      %s38 = sphi 0, %s37
      %s54 = sphi 0, %s38
      %s60 = sphi 0, %s62
      %s63 = sphi 0, %s60
      %s64 = sphi 0, %s63
      %s80 = sphi 0, %s64
      %s84 = sphi 0, %s84
      %s86 = sphi 0, %s84
      %s87 = sphi 0, %s86
      %s101 = sphi 0, %s87
      %s105 = sphi 0, %s105
      %s107 = sphi 0, %s105
      %s108 = sphi 0, %s107
      %s122 = sphi 0, %s108
      %s126 = sphi 0, %s126
      %s128 = sphi 0, %s126
      %s129 = sphi 0, %s128
      %s143 = sphi 0, %s129
      %s147 = sphi 0, %s147
      %s149 = sphi 0, %s147
      %s150 = sphi 0, %s149
      %s164 = sphi 0, %s150
      %s168 = sphi 0, %s168
      %s170 = sphi 0, %s168
      %s171 = sphi 0, %s170
      %s185 = sphi 0, %s171
      %s189 = sphi 0, %s189
      %s191 = sphi 0, %s189
      %s192 = sphi 0, %s191
      %s206 = sphi 0, %s192
      %s212 = sphi 0, %s214
      %s215 = sphi 0, %s212
      %s216 = sphi 0, %s215
      %s232 = sphi 0, %s216
    $region4: #{tpu_custom_call.1} parent=1 // loop_header_branch
      %27 = sbr.rel (%p25) target = $region8
    $region5: #{tpu_custom_call.1} parent=1 // loop_body
      %s29 = ssub.s32 %s24, 1
      %s30 = ssub.s32 %s24, 2
      %s31 = sadd.s32 %s24, 1
      %s32 = ssub.s32 %s24, %s31
      %p33 = scmp.eq.s32.totalorder %s32, 0
      %s35 = sadd.s32 %s34, 1
      %s36 = scalar_select %p33, %s34, %s35
      %p39 = pneg %p33
      %p40 = scmp.eq.s32.totalorder %s24, 1
      %p41 = por %p39, %p40
      %p42 = scmp.ne.s32.totalorder %s34, %s37
      %p43 = scmp.eq.s32.totalorder %s24, 0
      %p44 = por %p42, %p43
      %p45 = scmp.ne.s32.totalorder %s34, %s37
      %p46 = scmp.eq.s32.totalorder %s29, 1
      %p47 = por %p45, %p46
      %p48 = scmp.ne.s32.totalorder %s37, %s38
      %p49 = scmp.eq.s32.totalorder %s29, 0
      %p50 = por %p48, %p49
      %p51 = scmp.ne.s32.totalorder %s37, %s38
      %p52 = scmp.eq.s32.totalorder %s30, 1
      %p53 = por %p51, %p52
      %p55 = scmp.ne.s32.totalorder %s38, %s54
      %p56 = scmp.eq.s32.totalorder %s30, 0
      %p57 = por %p55, %p56
      %s58 = ssub.s32 %s24, %s31
      %p59 = scmp.eq.s32.totalorder %s58, 0
      %s61 = sadd.s32 %s60, 1
      %s62 = scalar_select %p59, %s60, %s61
      %p65 = pneg %p59
      %p66 = scmp.eq.s32.totalorder %s24, 1
      %p67 = por %p65, %p66
      %p68 = scmp.ne.s32.totalorder %s60, %s63
      %p69 = scmp.eq.s32.totalorder %s24, 0
      %p70 = por %p68, %p69
      %p71 = scmp.ne.s32.totalorder %s60, %s63
      %p72 = scmp.eq.s32.totalorder %s29, 1
      %p73 = por %p71, %p72
      %p74 = scmp.ne.s32.totalorder %s63, %s64
      %p75 = scmp.eq.s32.totalorder %s29, 0
      %p76 = por %p74, %p75
      %p77 = scmp.ne.s32.totalorder %s63, %s64
      %p78 = scmp.eq.s32.totalorder %s30, 1
      %p79 = por %p77, %p78
      %p81 = scmp.ne.s32.totalorder %s64, %s80
      %p82 = scmp.eq.s32.totalorder %s30, 0
      %p83 = por %p81, %p82
      %s85 = sadd.s32 %s84, 1
      %p88 = scmp.eq.s32.totalorder %s24, 1
      %p89 = scmp.ne.s32.totalorder %s84, %s86
      %p90 = scmp.eq.s32.totalorder %s24, 0
      %p91 = por %p89, %p90
      %p92 = scmp.ne.s32.totalorder %s84, %s86
      %p93 = scmp.eq.s32.totalorder %s29, 1
      %p94 = por %p92, %p93
      %p95 = scmp.ne.s32.totalorder %s86, %s87
      %p96 = scmp.eq.s32.totalorder %s29, 0
      %p97 = por %p95, %p96
      %p98 = scmp.ne.s32.totalorder %s86, %s87
      %p99 = scmp.eq.s32.totalorder %s30, 1
      %p100 = por %p98, %p99
      %p102 = scmp.ne.s32.totalorder %s87, %s101
      %p103 = scmp.eq.s32.totalorder %s30, 0
      %p104 = por %p102, %p103
      %s106 = sadd.s32 %s105, 1
      %p109 = scmp.eq.s32.totalorder %s24, 1
      %p110 = scmp.ne.s32.totalorder %s105, %s107
      %p111 = scmp.eq.s32.totalorder %s24, 0
      %p112 = por %p110, %p111
      %p113 = scmp.ne.s32.totalorder %s105, %s107
      %p114 = scmp.eq.s32.totalorder %s29, 1
      %p115 = por %p113, %p114
      %p116 = scmp.ne.s32.totalorder %s107, %s108
      %p117 = scmp.eq.s32.totalorder %s29, 0
      %p118 = por %p116, %p117
      %p119 = scmp.ne.s32.totalorder %s107, %s108
      %p120 = scmp.eq.s32.totalorder %s30, 1
      %p121 = por %p119, %p120
      %p123 = scmp.ne.s32.totalorder %s108, %s122
      %p124 = scmp.eq.s32.totalorder %s30, 0
      %p125 = por %p123, %p124
      %s127 = sadd.s32 %s126, 1
      %p130 = scmp.eq.s32.totalorder %s24, 1
      %p131 = scmp.ne.s32.totalorder %s126, %s128
      %p132 = scmp.eq.s32.totalorder %s24, 0
      %p133 = por %p131, %p132
      %p134 = scmp.ne.s32.totalorder %s126, %s128
      %p135 = scmp.eq.s32.totalorder %s29, 1
      %p136 = por %p134, %p135
      %p137 = scmp.ne.s32.totalorder %s128, %s129
      %p138 = scmp.eq.s32.totalorder %s29, 0
      %p139 = por %p137, %p138
      %p140 = scmp.ne.s32.totalorder %s128, %s129
      %p141 = scmp.eq.s32.totalorder %s30, 1
      %p142 = por %p140, %p141
      %p144 = scmp.ne.s32.totalorder %s129, %s143
      %p145 = scmp.eq.s32.totalorder %s30, 0
      %p146 = por %p144, %p145
      %s148 = sadd.s32 %s147, 1
      %p151 = scmp.eq.s32.totalorder %s24, 1
      %p152 = scmp.ne.s32.totalorder %s147, %s149
      %p153 = scmp.eq.s32.totalorder %s24, 0
      %p154 = por %p152, %p153
      %p155 = scmp.ne.s32.totalorder %s147, %s149
      %p156 = scmp.eq.s32.totalorder %s29, 1
      %p157 = por %p155, %p156
      %p158 = scmp.ne.s32.totalorder %s149, %s150
      %p159 = scmp.eq.s32.totalorder %s29, 0
      %p160 = por %p158, %p159
      %p161 = scmp.ne.s32.totalorder %s149, %s150
      %p162 = scmp.eq.s32.totalorder %s30, 1
      %p163 = por %p161, %p162
      %p165 = scmp.ne.s32.totalorder %s150, %s164
      %p166 = scmp.eq.s32.totalorder %s30, 0
      %p167 = por %p165, %p166
      %s169 = sadd.s32 %s168, 1
      %p172 = scmp.eq.s32.totalorder %s24, 1
      %p173 = scmp.ne.s32.totalorder %s168, %s170
      %p174 = scmp.eq.s32.totalorder %s24, 0
      %p175 = por %p173, %p174
      %p176 = scmp.ne.s32.totalorder %s168, %s170
      %p177 = scmp.eq.s32.totalorder %s29, 1
      %p178 = por %p176, %p177
      %p179 = scmp.ne.s32.totalorder %s170, %s171
      %p180 = scmp.eq.s32.totalorder %s29, 0
      %p181 = por %p179, %p180
      %p182 = scmp.ne.s32.totalorder %s170, %s171
      %p183 = scmp.eq.s32.totalorder %s30, 1
      %p184 = por %p182, %p183
      %p186 = scmp.ne.s32.totalorder %s171, %s185
      %p187 = scmp.eq.s32.totalorder %s30, 0
      %p188 = por %p186, %p187
      %s190 = sadd.s32 %s189, 1
      %p193 = scmp.eq.s32.totalorder %s24, 1
      %p194 = scmp.ne.s32.totalorder %s189, %s191
      %p195 = scmp.eq.s32.totalorder %s24, 0
      %p196 = por %p194, %p195
      %p197 = scmp.ne.s32.totalorder %s189, %s191
      %p198 = scmp.eq.s32.totalorder %s29, 1
      %p199 = por %p197, %p198
      %p200 = scmp.ne.s32.totalorder %s191, %s192
      %p201 = scmp.eq.s32.totalorder %s29, 0
      %p202 = por %p200, %p201
      %p203 = scmp.ne.s32.totalorder %s191, %s192
      %p204 = scmp.eq.s32.totalorder %s30, 1
      %p205 = por %p203, %p204
      %p207 = scmp.ne.s32.totalorder %s192, %s206
      %p208 = scmp.eq.s32.totalorder %s30, 0
      %p209 = por %p207, %p208
      %s210 = ssub.s32 %s24, %s31
      %p211 = scmp.eq.s32.totalorder %s210, 0
      %s213 = sadd.s32 %s212, 1
      %s214 = scalar_select %p211, %s212, %s213
      %p217 = pneg %p211
      %p218 = scmp.eq.s32.totalorder %s24, 1
      %p219 = por %p217, %p218
      %p220 = scmp.ne.s32.totalorder %s212, %s215
      %p221 = scmp.eq.s32.totalorder %s24, 0
      %p222 = por %p220, %p221
      %p223 = scmp.ne.s32.totalorder %s212, %s215
      %p224 = scmp.eq.s32.totalorder %s29, 1
      %p225 = por %p223, %p224
      %p226 = scmp.ne.s32.totalorder %s215, %s216
      %p227 = scmp.eq.s32.totalorder %s29, 0
      %p228 = por %p226, %p227
      %p229 = scmp.ne.s32.totalorder %s215, %s216
      %p230 = scmp.eq.s32.totalorder %s30, 1
      %p231 = por %p229, %p230
      %p233 = scmp.ne.s32.totalorder %s216, %s232
      %p234 = scmp.eq.s32.totalorder %s30, 0
      %p235 = por %p233, %p234
      %p236 = scmp.le.s32.totalorder 1, %s24
      %p237 = scmp.lt.s32.totalorder %s24, 3
      %p238 = pnand %p236, %p237
      %p239 = pneg %p238
      // Predicated region
      $region9: #{tpu_custom_call.1} parent=5 // pred_check
        _
      $region10: #{tpu_custom_call.1} parent=5 // pred_check_branch
        %241 = sbr.rel (%p238) target = $region12
      $region11: #{tpu_custom_call.1} parent=5 // pred_region
        %s242 = ssub.s32 %s24, 1
        // Predicated region
        $region13: #{tpu_custom_call.1} parent=11 // pred_check
          %p243 = pneg %p97
        $region14: #{tpu_custom_call.1} parent=11 // pred_check_branch
          %245 = sbr.rel (%p243) target = $region16
        $region15: #{tpu_custom_call.1} parent=11 // pred_region
          %s247 = ssub.s32 1024, 1024
          %248 = vsyncadd [#allocation6], %s247
          %s249 = sshll.u32 [#allocation7], 4
          %s250 = int_to_ptr.vmem [resolvable:$true] %s249
          %255 = dma.hbm_to_vmem [thread:$0]  %s2, 1024, %s250, [#allocation6], 64, 64, 4
        $region16: #{tpu_custom_call.1} parent=11 // pred_fallthru
          _
        // Predicated region
        $region17: #{tpu_custom_call.1} parent=11 // pred_check
          %p256 = pneg %p118
        $region18: #{tpu_custom_call.1} parent=11 // pred_check_branch
          %258 = sbr.rel (%p256) target = $region20
        $region19: #{tpu_custom_call.1} parent=11 // pred_region
          _
        $region20: #{tpu_custom_call.1} parent=11 // pred_fallthru
          _
        // Predicated region
        $region21: #{tpu_custom_call.1} parent=11 // pred_check
          %p259 = pneg %p139
        $region22: #{tpu_custom_call.1} parent=11 // pred_check_branch
          %261 = sbr.rel (%p259) target = $region24
        $region23: #{tpu_custom_call.1} parent=11 // pred_region
          %s263 = ssub.s32 1024, 1024
          %264 = vsyncadd [#allocation9], %s263
          %s265 = sshll.u32 [#allocation8], 4
          %s266 = int_to_ptr.vmem [resolvable:$true] %s265
          %271 = dma.hbm_to_vmem [thread:$0]  %s4, 1024, %s266, [#allocation9], 64, 64, 4
        $region24: #{tpu_custom_call.1} parent=11 // pred_fallthru
          _
        // Predicated region
        $region25: #{tpu_custom_call.1} parent=11 // pred_check
          %p272 = pneg %p160
        $region26: #{tpu_custom_call.1} parent=11 // pred_check_branch
          %274 = sbr.rel (%p272) target = $region28
        $region27: #{tpu_custom_call.1} parent=11 // pred_region
          _
        $region28: #{tpu_custom_call.1} parent=11 // pred_fallthru
          _
        // Predicated region
        $region29: #{tpu_custom_call.1} parent=11 // pred_check
          %p275 = pneg %p181
        $region30: #{tpu_custom_call.1} parent=11 // pred_check_branch
          %277 = sbr.rel (%p275) target = $region32
        $region31: #{tpu_custom_call.1} parent=11 // pred_region
          %s279 = ssub.s32 2048, 2048
          %280 = vsyncadd [#allocation9], %s279
          %s281 = sshll.u32 [#allocation10], 4
          %s282 = int_to_ptr.vmem [resolvable:$true] %s281
          %287 = dma.hbm_to_vmem [thread:$0]  %s6, 2048, %s282, [#allocation9], 64, 64, 4
        $region32: #{tpu_custom_call.1} parent=11 // pred_fallthru
          _
        // Predicated region
        $region33: #{tpu_custom_call.1} parent=11 // pred_check
          %p288 = pneg %p202
        $region34: #{tpu_custom_call.1} parent=11 // pred_check_branch
          %290 = sbr.rel (%p288) target = $region36
        $region35: #{tpu_custom_call.1} parent=11 // pred_region
          _
        $region36: #{tpu_custom_call.1} parent=11 // pred_fallthru
          _
      $region12: #{tpu_custom_call.1} parent=5 // pred_fallthru
        _
      %p291 = scmp.lt.s32.totalorder %s24, 2
      // Predicated region
      $region37: #{tpu_custom_call.1} parent=5 // pred_check
        %p292 = pneg %p291
      $region38: #{tpu_custom_call.1} parent=5 // pred_check_branch
        %294 = sbr.rel (%p292) target = $region40
      $region39: #{tpu_custom_call.1} parent=5 // pred_region
        // Predicated region
        $region41: #{tpu_custom_call.1} parent=39 // pred_check
          %p295 = pneg %p44
        $region42: #{tpu_custom_call.1} parent=39 // pred_check_branch
          %297 = sbr.rel (%p295) target = $region44
        $region43: #{tpu_custom_call.1} parent=39 // pred_region
          %s298 = sand.u32 %s34, 1
          %s299 = scalar_lea.sflag [#allocation3], %s298
          %s300 = sand.u32 %s34, 1
          %s301 = smul.addr %s300, 128
          %s302 = scalar_lea.vmem [#allocation2], %s301
          %s304 = ssub.s32 2048, 2048
          %305 = vsyncadd %s299, %s304
          %s306 = smul.addr %s24, 32
          %s307 = smul.addr %s306, 64
          %s308 = scalar_lea.hbm %s0, %s307
          %s309 = sshll.u32 %s302, 4
          %s310 = int_to_ptr.vmem [resolvable:$true] %s309
          %315 = dma.hbm_to_vmem [thread:$0]  %s308, 2048, %s310, %s299, 64, 64, 4
        $region44: #{tpu_custom_call.1} parent=39 // pred_fallthru
          _
        // Predicated region
        $region45: #{tpu_custom_call.1} parent=39 // pred_check
          %p316 = pneg %p70
        $region46: #{tpu_custom_call.1} parent=39 // pred_check_branch
          %318 = sbr.rel (%p316) target = $region48
        $region47: #{tpu_custom_call.1} parent=39 // pred_region
          %s319 = sand.u32 %s24, 1
          %s320 = scalar_lea.sflag [#allocation6], %s319
          %s321 = sand.u32 %s60, 1
          %s322 = smul.addr %s321, 128
          %s323 = scalar_lea.vmem [#allocation5], %s322
          %s325 = ssub.s32 2048, 2048
          %326 = vsyncadd %s320, %s325
          %s327 = smul.addr %s24, 32
          %s328 = smul.addr %s327, 64
          %s329 = scalar_lea.hbm %s1, %s328
          %s330 = sshll.u32 %s323, 4
          %s331 = int_to_ptr.vmem [resolvable:$true] %s330
          %336 = dma.hbm_to_vmem [thread:$0]  %s329, 2048, %s331, %s320, 64, 64, 4
        $region48: #{tpu_custom_call.1} parent=39 // pred_fallthru
          _
      $region40: #{tpu_custom_call.1} parent=5 // pred_fallthru
        _
      %p337 = scmp.le.s32.totalorder 1, %s24
      %p338 = scmp.lt.s32.totalorder %s24, 3
      %p339 = pnand %p337, %p338
      %p340 = pneg %p339
      // Predicated region
      $region49: #{tpu_custom_call.1} parent=5 // pred_check
        _
      $region50: #{tpu_custom_call.1} parent=5 // pred_check_branch
        %342 = sbr.rel (%p339) target = $region52
      $region51: #{tpu_custom_call.1} parent=5 // pred_region
        %s343 = ssub.s32 %s24, 1
        %s344 = sand.u32 %s37, 1
        %s345 = scalar_lea.sflag [#allocation3], %s344
        %s346 = sand.u32 %s37, 1
        %s347 = smul.addr %s346, 128
        %s348 = scalar_lea.vmem [#allocation2], %s347
        // Predicated region
        $region53: #{tpu_custom_call.1} parent=51 // pred_check
          %p349 = pneg %p50
        $region54: #{tpu_custom_call.1} parent=51 // pred_check_branch
          %351 = sbr.rel (%p349) target = $region56
        $region55: #{tpu_custom_call.1} parent=51 // pred_region
          %352 = dma.done %s345, 2048
        $region56: #{tpu_custom_call.1} parent=51 // pred_fallthru
          _
        %s353 = sand.u32 %s29, 1
        %s354 = scalar_lea.sflag [#allocation6], %s353
        %s355 = sand.u32 %s63, 1
        %s356 = smul.addr %s355, 128
        %s357 = scalar_lea.vmem [#allocation5], %s356
        // Predicated region
        $region57: #{tpu_custom_call.1} parent=51 // pred_check
          %p358 = pneg %p76
        $region58: #{tpu_custom_call.1} parent=51 // pred_check_branch
          %360 = sbr.rel (%p358) target = $region60
        $region59: #{tpu_custom_call.1} parent=51 // pred_region
          %361 = dma.done %s354, 2048
        $region60: #{tpu_custom_call.1} parent=51 // pred_fallthru
          _
        // Predicated region
        $region61: #{tpu_custom_call.1} parent=51 // pred_check
          %p362 = pneg %p97
        $region62: #{tpu_custom_call.1} parent=51 // pred_check_branch
          %364 = sbr.rel (%p362) target = $region64
        $region63: #{tpu_custom_call.1} parent=51 // pred_region
          %365 = dma.done [#allocation6], 1024
        $region64: #{tpu_custom_call.1} parent=51 // pred_fallthru
          _
        // Predicated region
        $region65: #{tpu_custom_call.1} parent=51 // pred_check
          %p366 = pneg %p139
        $region66: #{tpu_custom_call.1} parent=51 // pred_check_branch
          %368 = sbr.rel (%p366) target = $region68
        $region67: #{tpu_custom_call.1} parent=51 // pred_region
          %369 = dma.done [#allocation9], 1024
        $region68: #{tpu_custom_call.1} parent=51 // pred_fallthru
          _
        // Predicated region
        $region69: #{tpu_custom_call.1} parent=51 // pred_check
          %p370 = pneg %p181
        $region70: #{tpu_custom_call.1} parent=51 // pred_check_branch
          %372 = sbr.rel (%p370) target = $region72
        $region71: #{tpu_custom_call.1} parent=51 // pred_region
          %373 = dma.done [#allocation9], 2048
        $region72: #{tpu_custom_call.1} parent=51 // pred_fallthru
          _
        %s374 = sand.u32 %s37, 1
        %s375 = scalar_lea.sflag [#allocation3], %s374
        %s376 = sand.u32 %s37, 1
        %s377 = smul.addr %s376, 128
        %s378 = scalar_lea.vmem [#allocation2], %s377
        %p379 = pneg %p50
        %p380 = pneg %p47
        %s381 = sand.u32 %s29, 1
        %s382 = scalar_lea.sflag [#allocation6], %s381
        %s383 = sand.u32 %s63, 1
        %s384 = smul.addr %s383, 128
        %s385 = scalar_lea.vmem [#allocation5], %s384
        %p386 = pneg %p76
        %p387 = pneg %p73
        %p388 = pneg %p97
        %p389 = pneg %p94
        %p390 = pneg %p118
        %p391 = pneg %p115
        %p392 = pneg %p139
        %p393 = pneg %p136
        %p394 = pneg %p160
        %p395 = pneg %p157
        %p396 = pneg %p181
        %p397 = pneg %p178
        %p398 = pneg %p202
        %p399 = pneg %p199
        %p400 = pneg %p228
        %p401 = pneg %p225
        %s402 = sand.u32 %s215, 1
        %s403 = scalar_lea.sflag [#allocation4], %s402
        %s404 = sand.u32 %s215, 1
        %s405 = smul.addr %s404, 256
        %s406 = scalar_lea.vmem [#allocation11], %s405
        %v409 = vld [vmem:[%s348] sm:$0xf]
        %v410 = vld [vmem:[%s348 + $0x4] sm:$0xf]
        %v411 = vld [vmem:[%s348 + $0x8] sm:$0xf]
        %v412 = vld [vmem:[%s348 + $0xc] sm:$0xf]
        %v413 = vld [vmem:[%s348 + $0x10] sm:$0xf]
        %v414 = vld [vmem:[%s348 + $0x14] sm:$0xf]
        %v415 = vld [vmem:[%s348 + $0x18] sm:$0xf]
        %v416 = vld [vmem:[%s348 + $0x1c] sm:$0xf]
        %v417 = vld [vmem:[%s348 + $0x20] sm:$0xf]
        %v418 = vld [vmem:[%s348 + $0x24] sm:$0xf]
        %v419 = vld [vmem:[%s348 + $0x28] sm:$0xf]
        %v420 = vld [vmem:[%s348 + $0x2c] sm:$0xf]
        %v421 = vld [vmem:[%s348 + $0x30] sm:$0xf]
        %v422 = vld [vmem:[%s348 + $0x34] sm:$0xf]
        %v423 = vld [vmem:[%s348 + $0x38] sm:$0xf]
        %v424 = vld [vmem:[%s348 + $0x3c] sm:$0xf]
        %v425 = vld [vmem:[%s348 + $0x40] sm:$0xf]
        %v426 = vld [vmem:[%s348 + $0x44] sm:$0xf]
        %v427 = vld [vmem:[%s348 + $0x48] sm:$0xf]
        %v428 = vld [vmem:[%s348 + $0x4c] sm:$0xf]
        %v429 = vld [vmem:[%s348 + $0x50] sm:$0xf]
        %v430 = vld [vmem:[%s348 + $0x54] sm:$0xf]
        %v431 = vld [vmem:[%s348 + $0x58] sm:$0xf]
        %v432 = vld [vmem:[%s348 + $0x5c] sm:$0xf]
        %v433 = vld [vmem:[%s348 + $0x60] sm:$0xf]
        %v434 = vld [vmem:[%s348 + $0x64] sm:$0xf]
        %v435 = vld [vmem:[%s348 + $0x68] sm:$0xf]
        %v436 = vld [vmem:[%s348 + $0x6c] sm:$0xf]
        %v437 = vld [vmem:[%s348 + $0x70] sm:$0xf]
        %v438 = vld [vmem:[%s348 + $0x74] sm:$0xf]
        %v439 = vld [vmem:[%s348 + $0x78] sm:$0xf]
        %v440 = vld [vmem:[%s348 + $0x7c] sm:$0xf]
        %v441 = vld [vmem:[%s357] sm:$0xf]
        %v442 = vld [vmem:[%s357 + $0x4] sm:$0xf]
        %v443 = vld [vmem:[%s357 + $0x8] sm:$0xf]
        %v444 = vld [vmem:[%s357 + $0xc] sm:$0xf]
        %v445 = vld [vmem:[%s357 + $0x10] sm:$0xf]
        %v446 = vld [vmem:[%s357 + $0x14] sm:$0xf]
        %v447 = vld [vmem:[%s357 + $0x18] sm:$0xf]
        %v448 = vld [vmem:[%s357 + $0x1c] sm:$0xf]
        %v449 = vld [vmem:[%s357 + $0x20] sm:$0xf]
        %v450 = vld [vmem:[%s357 + $0x24] sm:$0xf]
        %v451 = vld [vmem:[%s357 + $0x28] sm:$0xf]
        %v452 = vld [vmem:[%s357 + $0x2c] sm:$0xf]
        %v453 = vld [vmem:[%s357 + $0x30] sm:$0xf]
        %v454 = vld [vmem:[%s357 + $0x34] sm:$0xf]
        %v455 = vld [vmem:[%s357 + $0x38] sm:$0xf]
        %v456 = vld [vmem:[%s357 + $0x3c] sm:$0xf]
        %v457 = vld [vmem:[%s357 + $0x40] sm:$0xf]
        %v458 = vld [vmem:[%s357 + $0x44] sm:$0xf]
        %v459 = vld [vmem:[%s357 + $0x48] sm:$0xf]
        %v460 = vld [vmem:[%s357 + $0x4c] sm:$0xf]
        %v461 = vld [vmem:[%s357 + $0x50] sm:$0xf]
        %v462 = vld [vmem:[%s357 + $0x54] sm:$0xf]
        %v463 = vld [vmem:[%s357 + $0x58] sm:$0xf]
        %v464 = vld [vmem:[%s357 + $0x5c] sm:$0xf]
        %v465 = vld [vmem:[%s357 + $0x60] sm:$0xf]
        %v466 = vld [vmem:[%s357 + $0x64] sm:$0xf]
        %v467 = vld [vmem:[%s357 + $0x68] sm:$0xf]
        %v468 = vld [vmem:[%s357 + $0x6c] sm:$0xf]
        %v469 = vld [vmem:[%s357 + $0x70] sm:$0xf]
        %v470 = vld [vmem:[%s357 + $0x74] sm:$0xf]
        %v471 = vld [vmem:[%s357 + $0x78] sm:$0xf]
        %v472 = vld [vmem:[%s357 + $0x7c] sm:$0xf]
        %v505 = vunpack.c.l.b16 %v409
        %v506 = vunpack.c.l.b16 %v410
        %v507 = vunpack.c.l.b16 %v411
        %v508 = vunpack.c.l.b16 %v412
        %v509 = vunpack.c.l.b16 %v413
        %v510 = vunpack.c.l.b16 %v414
        %v511 = vunpack.c.l.b16 %v415
        %v512 = vunpack.c.l.b16 %v416
        %v513 = vunpack.c.l.b16 %v417
        %v514 = vunpack.c.l.b16 %v418
        %v515 = vunpack.c.l.b16 %v419
        %v516 = vunpack.c.l.b16 %v420
        %v517 = vunpack.c.l.b16 %v421
        %v518 = vunpack.c.l.b16 %v422
        %v519 = vunpack.c.l.b16 %v423
        %v520 = vunpack.c.l.b16 %v424
        %v521 = vunpack.c.l.b16 %v425
        %v522 = vunpack.c.l.b16 %v426
        %v523 = vunpack.c.l.b16 %v427
        %v524 = vunpack.c.l.b16 %v428
        %v525 = vunpack.c.l.b16 %v429
        %v526 = vunpack.c.l.b16 %v430
        %v527 = vunpack.c.l.b16 %v431
        %v528 = vunpack.c.l.b16 %v432
        %v529 = vunpack.c.l.b16 %v433
        %v530 = vunpack.c.l.b16 %v434
        %v531 = vunpack.c.l.b16 %v435
        %v532 = vunpack.c.l.b16 %v436
        %v533 = vunpack.c.l.b16 %v437
        %v534 = vunpack.c.l.b16 %v438
        %v535 = vunpack.c.l.b16 %v439
        %v536 = vunpack.c.l.b16 %v440
        %v537 = vpack.c.b16 %v506, %v505
        %v538 = vpack.c.b16 %v508, %v507
        %v539 = vpack.c.b16 %v510, %v509
        %v540 = vpack.c.b16 %v512, %v511
        %v541 = vpack.c.b16 %v514, %v513
        %v542 = vpack.c.b16 %v516, %v515
        %v543 = vpack.c.b16 %v518, %v517
        %v544 = vpack.c.b16 %v520, %v519
        %v545 = vpack.c.b16 %v522, %v521
        %v546 = vpack.c.b16 %v524, %v523
        %v547 = vpack.c.b16 %v526, %v525
        %v548 = vpack.c.b16 %v528, %v527
        %v549 = vpack.c.b16 %v530, %v529
        %v550 = vpack.c.b16 %v532, %v531
        %v551 = vpack.c.b16 %v534, %v533
        %v552 = vpack.c.b16 %v536, %v535
        %569 = vmatprep.subr.bf16.mxu0 0
        %570 = vmatpush1.bf16.msra.mxu0 %v537
        %571 = vmatprep.subr.bf16.mxu0 0
        %572 = vmatpush1.bf16.msra.mxu0 %v538
        %573 = vmatprep.subr.bf16.mxu0 0
        %574 = vmatpush1.bf16.msra.mxu0 %v539
        %575 = vmatprep.subr.bf16.mxu0 0
        %576 = vmatpush1.bf16.msra.mxu0 %v540
        %577 = vmatprep.subr.bf16.mxu0 0
        %578 = vmatpush1.bf16.msra.mxu0 %v541
        %579 = vmatprep.subr.bf16.mxu0 0
        %580 = vmatpush1.bf16.msra.mxu0 %v542
        %581 = vmatprep.subr.bf16.mxu0 0
        %582 = vmatpush1.bf16.msra.mxu0 %v543
        %583 = vmatprep.subr.bf16.mxu0 0
        %584 = vmatpush1.bf16.msra.mxu0 %v544
        %585 = vmatprep.subr.bf16.mxu0 0
        %586 = vmatpush1.bf16.msra.mxu0 %v545
        %587 = vmatprep.subr.bf16.mxu0 0
        %588 = vmatpush1.bf16.msra.mxu0 %v546
        %589 = vmatprep.subr.bf16.mxu0 0
        %590 = vmatpush1.bf16.msra.mxu0 %v547
        %591 = vmatprep.subr.bf16.mxu0 0
        %592 = vmatpush1.bf16.msra.mxu0 %v548
        %593 = vmatprep.subr.bf16.mxu0 0
        %594 = vmatpush1.bf16.msra.mxu0 %v549
        %595 = vmatprep.subr.bf16.mxu0 0
        %596 = vmatpush1.bf16.msra.mxu0 %v550
        %597 = vmatprep.subr.bf16.mxu0 0
        %598 = vmatpush1.bf16.msra.mxu0 %v551
        %599 = vmatprep.subr.bf16.mxu0 0
        %600 = vmatpush1.bf16.msra.mxu0 %v552
        %601 = vmatprep.mubr.bf16.mxu0 1065369472
        %602 = vmatmul.mubr.bf16.gmra.mrb[0].mxu0 1065369472
        %v603 = vpop.f32.mrb[0].mxu0
        %v604 = vadd.f32 0.0, %v603
        %v605 = vpop.f32.mrb[0].mxu0
        %v606 = vpop.f32.mrb[0].mxu0
        %v607 = vpop.f32.mrb[0].mxu0
        %608 = vdwg.mxu0
        %v609 = vmul.f32 %v604, 0.00390625
        %v610 = vpack.c.bf16 %v609, %v609
        %v643 = vunpack.c.l.b16 %v441
        %v644 = vunpack.c.l.b16 %v442
        %v645 = vunpack.c.l.b16 %v443
        %v646 = vunpack.c.l.b16 %v444
        %v647 = vunpack.c.l.b16 %v445
        %v648 = vunpack.c.l.b16 %v446
        %v649 = vunpack.c.l.b16 %v447
        %v650 = vunpack.c.l.b16 %v448
        %v651 = vunpack.c.l.b16 %v449
        %v652 = vunpack.c.l.b16 %v450
        %v653 = vunpack.c.l.b16 %v451
        %v654 = vunpack.c.l.b16 %v452
        %v655 = vunpack.c.l.b16 %v453
        %v656 = vunpack.c.l.b16 %v454
        %v657 = vunpack.c.l.b16 %v455
        %v658 = vunpack.c.l.b16 %v456
        %v659 = vunpack.c.l.b16 %v457
        %v660 = vunpack.c.l.b16 %v458
        %v661 = vunpack.c.l.b16 %v459
        %v662 = vunpack.c.l.b16 %v460
        %v663 = vunpack.c.l.b16 %v461
        %v664 = vunpack.c.l.b16 %v462
        %v665 = vunpack.c.l.b16 %v463
        %v666 = vunpack.c.l.b16 %v464
        %v667 = vunpack.c.l.b16 %v465
        %v668 = vunpack.c.l.b16 %v466
        %v669 = vunpack.c.l.b16 %v467
        %v670 = vunpack.c.l.b16 %v468
        %v671 = vunpack.c.l.b16 %v469
        %v672 = vunpack.c.l.b16 %v470
        %v673 = vunpack.c.l.b16 %v471
        %v674 = vunpack.c.l.b16 %v472
        %v675 = vpack.c.b16 %v644, %v643
        %v676 = vpack.c.b16 %v646, %v645
        %v677 = vpack.c.b16 %v648, %v647
        %v678 = vpack.c.b16 %v650, %v649
        %v679 = vpack.c.b16 %v652, %v651
        %v680 = vpack.c.b16 %v654, %v653
        %v681 = vpack.c.b16 %v656, %v655
        %v682 = vpack.c.b16 %v658, %v657
        %v683 = vpack.c.b16 %v660, %v659
        %v684 = vpack.c.b16 %v662, %v661
        %v685 = vpack.c.b16 %v664, %v663
        %v686 = vpack.c.b16 %v666, %v665
        %v687 = vpack.c.b16 %v668, %v667
        %v688 = vpack.c.b16 %v670, %v669
        %v689 = vpack.c.b16 %v672, %v671
        %v690 = vpack.c.b16 %v674, %v673
        %707 = vmatprep.subr.bf16.mxu0 0
        %708 = vmatpush1.bf16.msra.mxu0 %v675
        %709 = vmatprep.subr.bf16.mxu0 0
        %710 = vmatpush1.bf16.msra.mxu0 %v676
        %711 = vmatprep.subr.bf16.mxu0 0
        %712 = vmatpush1.bf16.msra.mxu0 %v677
        %713 = vmatprep.subr.bf16.mxu0 0
        %714 = vmatpush1.bf16.msra.mxu0 %v678
        %715 = vmatprep.subr.bf16.mxu0 0
        %716 = vmatpush1.bf16.msra.mxu0 %v679
        %717 = vmatprep.subr.bf16.mxu0 0
        %718 = vmatpush1.bf16.msra.mxu0 %v680
        %719 = vmatprep.subr.bf16.mxu0 0
        %720 = vmatpush1.bf16.msra.mxu0 %v681
        %721 = vmatprep.subr.bf16.mxu0 0
        %722 = vmatpush1.bf16.msra.mxu0 %v682
        %723 = vmatprep.subr.bf16.mxu0 0
        %724 = vmatpush1.bf16.msra.mxu0 %v683
        %725 = vmatprep.subr.bf16.mxu0 0
        %726 = vmatpush1.bf16.msra.mxu0 %v684
        %727 = vmatprep.subr.bf16.mxu0 0
        %728 = vmatpush1.bf16.msra.mxu0 %v685
        %729 = vmatprep.subr.bf16.mxu0 0
        %730 = vmatpush1.bf16.msra.mxu0 %v686
        %731 = vmatprep.subr.bf16.mxu0 0
        %732 = vmatpush1.bf16.msra.mxu0 %v687
        %733 = vmatprep.subr.bf16.mxu0 0
        %734 = vmatpush1.bf16.msra.mxu0 %v688
        %735 = vmatprep.subr.bf16.mxu0 0
        %736 = vmatpush1.bf16.msra.mxu0 %v689
        %737 = vmatprep.subr.bf16.mxu0 0
        %738 = vmatpush1.bf16.msra.mxu0 %v690
        %739 = vmatprep.mubr.bf16.mxu0 1065369472
        %740 = vmatmul.mubr.bf16.gmra.mrb[0].mxu0 1065369472
        %v741 = vpop.f32.mrb[0].mxu0
        %v742 = vadd.f32 0.0, %v741
        %v743 = vpop.f32.mrb[0].mxu0
        %v744 = vpop.f32.mrb[0].mxu0
        %v745 = vpop.f32.mrb[0].mxu0
        %746 = vdwg.mxu0
        %v747 = vmul.f32 %v742, 0.00390625
        %v748 = vpack.c.bf16 %v747, %v747
        %v749 = vld [vmem:[#allocation7] sm:$0xf]
        %v750 = vld [vmem:[#allocation7 + $0x4] sm:$0xf]
        %v751 = vld [vmem:[#allocation7 + $0x8] sm:$0xf]
        %v752 = vld [vmem:[#allocation7 + $0xc] sm:$0xf]
        %v753 = vld [vmem:[#allocation7 + $0x10] sm:$0xf]
        %v754 = vld [vmem:[#allocation7 + $0x14] sm:$0xf]
        %v755 = vld [vmem:[#allocation7 + $0x18] sm:$0xf]
        %v756 = vld [vmem:[#allocation7 + $0x1c] sm:$0xf]
        %v757 = vld [vmem:[#allocation7 + $0x20] sm:$0xf]
        %v758 = vld [vmem:[#allocation7 + $0x24] sm:$0xf]
        %v759 = vld [vmem:[#allocation7 + $0x28] sm:$0xf]
        %v760 = vld [vmem:[#allocation7 + $0x2c] sm:$0xf]
        %v761 = vld [vmem:[#allocation7 + $0x30] sm:$0xf]
        %v762 = vld [vmem:[#allocation7 + $0x34] sm:$0xf]
        %v763 = vld [vmem:[#allocation7 + $0x38] sm:$0xf]
        %v764 = vld [vmem:[#allocation7 + $0x3c] sm:$0xf]
        %v765 = vld [vmem:[%s3] sm:$0x1]
        %v782 = vunpack.c.l.b16 %v749
        %v783 = vunpack.c.l.b16 %v750
        %v784 = vunpack.c.l.b16 %v751
        %v785 = vunpack.c.l.b16 %v752
        %v786 = vunpack.c.l.b16 %v753
        %v787 = vunpack.c.l.b16 %v754
        %v788 = vunpack.c.l.b16 %v755
        %v789 = vunpack.c.l.b16 %v756
        %v790 = vunpack.c.l.b16 %v757
        %v791 = vunpack.c.l.b16 %v758
        %v792 = vunpack.c.l.b16 %v759
        %v793 = vunpack.c.l.b16 %v760
        %v794 = vunpack.c.l.b16 %v761
        %v795 = vunpack.c.l.b16 %v762
        %v796 = vunpack.c.l.b16 %v763
        %v797 = vunpack.c.l.b16 %v764
        %v798 = vpack.c.b16 %v783, %v782
        %v799 = vpack.c.b16 %v785, %v784
        %v800 = vpack.c.b16 %v787, %v786
        %v801 = vpack.c.b16 %v789, %v788
        %v802 = vpack.c.b16 %v791, %v790
        %v803 = vpack.c.b16 %v793, %v792
        %v804 = vpack.c.b16 %v795, %v794
        %v805 = vpack.c.b16 %v797, %v796
        %814 = vmatprep.subr.bf16.mxu0 0
        %815 = vmatpush1.bf16.msra.mxu0 %v798
        %816 = vmatprep.subr.bf16.mxu0 0
        %817 = vmatpush1.bf16.msra.mxu0 %v799
        %818 = vmatprep.subr.bf16.mxu0 0
        %819 = vmatpush1.bf16.msra.mxu0 %v800
        %820 = vmatprep.subr.bf16.mxu0 0
        %821 = vmatpush1.bf16.msra.mxu0 %v801
        %822 = vmatprep.subr.bf16.mxu0 0
        %823 = vmatpush1.bf16.msra.mxu0 %v802
        %824 = vmatprep.subr.bf16.mxu0 0
        %825 = vmatpush1.bf16.msra.mxu0 %v803
        %826 = vmatprep.subr.bf16.mxu0 0
        %827 = vmatpush1.bf16.msra.mxu0 %v804
        %828 = vmatprep.subr.bf16.mxu0 0
        %829 = vmatpush1.bf16.msra.mxu0 %v805
        %830 = vmatprep.subr.bf16.mxu0 0
        %831 = vmatpush1.bf16.msra.mxu0 0
        %832 = vmatprep.subr.bf16.mxu0 0
        %833 = vmatpush1.bf16.msra.mxu0 0
        %834 = vmatprep.subr.bf16.mxu0 0
        %835 = vmatpush1.bf16.msra.mxu0 0
        %836 = vmatprep.subr.bf16.mxu0 0
        %837 = vmatpush1.bf16.msra.mxu0 0
        %838 = vmatprep.subr.bf16.mxu0 0
        %839 = vmatpush1.bf16.msra.mxu0 0
        %840 = vmatprep.subr.bf16.mxu0 0
        %841 = vmatpush1.bf16.msra.mxu0 0
        %842 = vmatprep.subr.bf16.mxu0 0
        %843 = vmatpush1.bf16.msra.mxu0 0
        %844 = vmatprep.subr.bf16.mxu0 0
        %845 = vmatpush1.bf16.msra.mxu0 0
        %846 = vmatprep.mubr.bf16.mxu0 0
        %847 = vmatmul.mubr.bf16.gmra.mrb[0].mxu0 %v610
        %v848 = vpop.f32.mrb[0].mxu0
        %v849 = vadd.f32 %v765, %v848
        %v850 = vpop.f32.mrb[0].mxu0
        %v851 = vpop.f32.mrb[0].mxu0
        %v852 = vpop.f32.mrb[0].mxu0
        %853 = vdwg.mxu0
        %v854 = vxor.u32 %v849, 2147483648
        %v855 = vmul.f32 %v854, 1.442695
        %v856 = vpow.pop %v855
        %v857 = vadd.f32 %v856, 1.0
        %v858 = vrcp.pop %v857
        %v859 = vmul.f32 1.0, %v858
        %v860 = vld [vmem:[#allocation8] sm:$0xf]
        %v861 = vld [vmem:[#allocation8 + $0x4] sm:$0xf]
        %v862 = vld [vmem:[#allocation8 + $0x8] sm:$0xf]
        %v863 = vld [vmem:[#allocation8 + $0xc] sm:$0xf]
        %v864 = vld [vmem:[#allocation8 + $0x10] sm:$0xf]
        %v865 = vld [vmem:[#allocation8 + $0x14] sm:$0xf]
        %v866 = vld [vmem:[#allocation8 + $0x18] sm:$0xf]
        %v867 = vld [vmem:[#allocation8 + $0x1c] sm:$0xf]
        %v868 = vld [vmem:[#allocation8 + $0x20] sm:$0xf]
        %v869 = vld [vmem:[#allocation8 + $0x24] sm:$0xf]
        %v870 = vld [vmem:[#allocation8 + $0x28] sm:$0xf]
        %v871 = vld [vmem:[#allocation8 + $0x2c] sm:$0xf]
        %v872 = vld [vmem:[#allocation8 + $0x30] sm:$0xf]
        %v873 = vld [vmem:[#allocation8 + $0x34] sm:$0xf]
        %v874 = vld [vmem:[#allocation8 + $0x38] sm:$0xf]
        %v875 = vld [vmem:[#allocation8 + $0x3c] sm:$0xf]
        %v876 = vld [vmem:[%s5] sm:$0x1]
        %v893 = vunpack.c.l.b16 %v860
        %v894 = vunpack.c.l.b16 %v861
        %v895 = vunpack.c.l.b16 %v862
        %v896 = vunpack.c.l.b16 %v863
        %v897 = vunpack.c.l.b16 %v864
        %v898 = vunpack.c.l.b16 %v865
        %v899 = vunpack.c.l.b16 %v866
        %v900 = vunpack.c.l.b16 %v867
        %v901 = vunpack.c.l.b16 %v868
        %v902 = vunpack.c.l.b16 %v869
        %v903 = vunpack.c.l.b16 %v870
        %v904 = vunpack.c.l.b16 %v871
        %v905 = vunpack.c.l.b16 %v872
        %v906 = vunpack.c.l.b16 %v873
        %v907 = vunpack.c.l.b16 %v874
        %v908 = vunpack.c.l.b16 %v875
        %v909 = vpack.c.b16 %v894, %v893
        %v910 = vpack.c.b16 %v896, %v895
        %v911 = vpack.c.b16 %v898, %v897
        %v912 = vpack.c.b16 %v900, %v899
        %v913 = vpack.c.b16 %v902, %v901
        %v914 = vpack.c.b16 %v904, %v903
        %v915 = vpack.c.b16 %v906, %v905
        %v916 = vpack.c.b16 %v908, %v907
        %925 = vmatprep.subr.bf16.mxu0 0
        %926 = vmatpush1.bf16.msra.mxu0 %v909
        %927 = vmatprep.subr.bf16.mxu0 0
        %928 = vmatpush1.bf16.msra.mxu0 %v910
        %929 = vmatprep.subr.bf16.mxu0 0
        %930 = vmatpush1.bf16.msra.mxu0 %v911
        %931 = vmatprep.subr.bf16.mxu0 0
        %932 = vmatpush1.bf16.msra.mxu0 %v912
        %933 = vmatprep.subr.bf16.mxu0 0
        %934 = vmatpush1.bf16.msra.mxu0 %v913
        %935 = vmatprep.subr.bf16.mxu0 0
        %936 = vmatpush1.bf16.msra.mxu0 %v914
        %937 = vmatprep.subr.bf16.mxu0 0
        %938 = vmatpush1.bf16.msra.mxu0 %v915
        %939 = vmatprep.subr.bf16.mxu0 0
        %940 = vmatpush1.bf16.msra.mxu0 %v916
        %941 = vmatprep.subr.bf16.mxu0 0
        %942 = vmatpush1.bf16.msra.mxu0 0
        %943 = vmatprep.subr.bf16.mxu0 0
        %944 = vmatpush1.bf16.msra.mxu0 0
        %945 = vmatprep.subr.bf16.mxu0 0
        %946 = vmatpush1.bf16.msra.mxu0 0
        %947 = vmatprep.subr.bf16.mxu0 0
        %948 = vmatpush1.bf16.msra.mxu0 0
        %949 = vmatprep.subr.bf16.mxu0 0
        %950 = vmatpush1.bf16.msra.mxu0 0
        %951 = vmatprep.subr.bf16.mxu0 0
        %952 = vmatpush1.bf16.msra.mxu0 0
        %953 = vmatprep.subr.bf16.mxu0 0
        %954 = vmatpush1.bf16.msra.mxu0 0
        %955 = vmatprep.subr.bf16.mxu0 0
        %956 = vmatpush1.bf16.msra.mxu0 0
        %957 = vmatprep.mubr.bf16.mxu0 0
        %958 = vmatmul.mubr.bf16.gmra.mrb[0].mxu0 %v748
        %v959 = vpop.f32.mrb[0].mxu0
        %v960 = vadd.f32 %v876, %v959
        %v961 = vpop.f32.mrb[0].mxu0
        %v962 = vpop.f32.mrb[0].mxu0
        %v963 = vpop.f32.mrb[0].mxu0
        %964 = vdwg.mxu0
        %v965 = vxor.u32 %v960, 2147483648
        %v966 = vmul.f32 %v965, 1.442695
        %v967 = vpow.pop %v966
        %v968 = vadd.f32 %v967, 1.0
        %v969 = vrcp.pop %v968
        %v970 = vmul.f32 1.0, %v969
        %v971 = vpack.c.bf16 %v970, %v970
        %v973 = vpack.i.b16 %v971, %v971
        %v975 = vlaneseq
        %v976 = vshrl.u32 %v975, 7
        %v977 = vsub.s32 0, %v976
        %v978 = vrot.slane %v973, %v977
        %v980 = vunpack.c.l.b16 %v978
        %v981 = vpack.c.b16 %v980, %v980
        %v983 = vmul.bf16 %v409, %v981
        %v984 = vmul.bf16 %v410, %v981
        %v985 = vmul.bf16 %v411, %v981
        %v986 = vmul.bf16 %v412, %v981
        %v987 = vmul.bf16 %v413, %v981
        %v988 = vmul.bf16 %v414, %v981
        %v989 = vmul.bf16 %v415, %v981
        %v990 = vmul.bf16 %v416, %v981
        %v991 = vmul.bf16 %v417, %v981
        %v992 = vmul.bf16 %v418, %v981
        %v993 = vmul.bf16 %v419, %v981
        %v994 = vmul.bf16 %v420, %v981
        %v995 = vmul.bf16 %v421, %v981
        %v996 = vmul.bf16 %v422, %v981
        %v997 = vmul.bf16 %v423, %v981
        %v998 = vmul.bf16 %v424, %v981
        %v999 = vmul.bf16 %v425, %v981
        %v1000 = vmul.bf16 %v426, %v981
        %v1001 = vmul.bf16 %v427, %v981
        %v1002 = vmul.bf16 %v428, %v981
        %v1003 = vmul.bf16 %v429, %v981
        %v1004 = vmul.bf16 %v430, %v981
        %v1005 = vmul.bf16 %v431, %v981
        %v1006 = vmul.bf16 %v432, %v981
        %v1007 = vmul.bf16 %v433, %v981
        %v1008 = vmul.bf16 %v434, %v981
        %v1009 = vmul.bf16 %v435, %v981
        %v1010 = vmul.bf16 %v436, %v981
        %v1011 = vmul.bf16 %v437, %v981
        %v1012 = vmul.bf16 %v438, %v981
        %v1013 = vmul.bf16 %v439, %v981
        %v1014 = vmul.bf16 %v440, %v981
        %v1015 = vpack.c.bf16 %v859, %v859
        %v1017 = vpack.i.b16 %v1015, %v1015
        %v1019 = vlaneseq
        %v1020 = vshrl.u32 %v1019, 7
        %v1021 = vsub.s32 0, %v1020
        %v1022 = vrot.slane %v1017, %v1021
        %v1024 = vunpack.c.l.b16 %v1022
        %v1025 = vpack.c.b16 %v1024, %v1024
        %v1027 = vmul.bf16 %v441, %v1025
        %v1028 = vmul.bf16 %v442, %v1025
        %v1029 = vmul.bf16 %v443, %v1025
        %v1030 = vmul.bf16 %v444, %v1025
        %v1031 = vmul.bf16 %v445, %v1025
        %v1032 = vmul.bf16 %v446, %v1025
        %v1033 = vmul.bf16 %v447, %v1025
        %v1034 = vmul.bf16 %v448, %v1025
        %v1035 = vmul.bf16 %v449, %v1025
        %v1036 = vmul.bf16 %v450, %v1025
        %v1037 = vmul.bf16 %v451, %v1025
        %v1038 = vmul.bf16 %v452, %v1025
        %v1039 = vmul.bf16 %v453, %v1025
        %v1040 = vmul.bf16 %v454, %v1025
        %v1041 = vmul.bf16 %v455, %v1025
        %v1042 = vmul.bf16 %v456, %v1025
        %v1043 = vmul.bf16 %v457, %v1025
        %v1044 = vmul.bf16 %v458, %v1025
        %v1045 = vmul.bf16 %v459, %v1025
        %v1046 = vmul.bf16 %v460, %v1025
        %v1047 = vmul.bf16 %v461, %v1025
        %v1048 = vmul.bf16 %v462, %v1025
        %v1049 = vmul.bf16 %v463, %v1025
        %v1050 = vmul.bf16 %v464, %v1025
        %v1051 = vmul.bf16 %v465, %v1025
        %v1052 = vmul.bf16 %v466, %v1025
        %v1053 = vmul.bf16 %v467, %v1025
        %v1054 = vmul.bf16 %v468, %v1025
        %v1055 = vmul.bf16 %v469, %v1025
        %v1056 = vmul.bf16 %v470, %v1025
        %v1057 = vmul.bf16 %v471, %v1025
        %v1058 = vmul.bf16 %v472, %v1025
        %v1091 = vunpack.c.l.b16 %v983
        %v1092 = vunpack.c.l.b16 %v984
        %v1093 = vunpack.c.l.b16 %v985
        %v1094 = vunpack.c.l.b16 %v986
        %v1095 = vunpack.c.l.b16 %v987
        %v1096 = vunpack.c.l.b16 %v988
        %v1097 = vunpack.c.l.b16 %v989
        %v1098 = vunpack.c.l.b16 %v990
        %v1099 = vunpack.c.l.b16 %v991
        %v1100 = vunpack.c.l.b16 %v992
        %v1101 = vunpack.c.l.b16 %v993
        %v1102 = vunpack.c.l.b16 %v994
        %v1103 = vunpack.c.l.b16 %v995
        %v1104 = vunpack.c.l.b16 %v996
        %v1105 = vunpack.c.l.b16 %v997
        %v1106 = vunpack.c.l.b16 %v998
        %v1107 = vunpack.c.l.b16 %v999
        %v1108 = vunpack.c.l.b16 %v1000
        %v1109 = vunpack.c.l.b16 %v1001
        %v1110 = vunpack.c.l.b16 %v1002
        %v1111 = vunpack.c.l.b16 %v1003
        %v1112 = vunpack.c.l.b16 %v1004
        %v1113 = vunpack.c.l.b16 %v1005
        %v1114 = vunpack.c.l.b16 %v1006
        %v1115 = vunpack.c.l.b16 %v1007
        %v1116 = vunpack.c.l.b16 %v1008
        %v1117 = vunpack.c.l.b16 %v1009
        %v1118 = vunpack.c.l.b16 %v1010
        %v1119 = vunpack.c.l.b16 %v1011
        %v1120 = vunpack.c.l.b16 %v1012
        %v1121 = vunpack.c.l.b16 %v1013
        %v1122 = vunpack.c.l.b16 %v1014
        %v1123 = vpack.c.b16 %v1092, %v1091
        %v1124 = vpack.c.b16 %v1094, %v1093
        %v1125 = vpack.c.b16 %v1096, %v1095
        %v1126 = vpack.c.b16 %v1098, %v1097
        %v1127 = vpack.c.b16 %v1100, %v1099
        %v1128 = vpack.c.b16 %v1102, %v1101
        %v1129 = vpack.c.b16 %v1104, %v1103
        %v1130 = vpack.c.b16 %v1106, %v1105
        %v1131 = vpack.c.b16 %v1108, %v1107
        %v1132 = vpack.c.b16 %v1110, %v1109
        %v1133 = vpack.c.b16 %v1112, %v1111
        %v1134 = vpack.c.b16 %v1114, %v1113
        %v1135 = vpack.c.b16 %v1116, %v1115
        %v1136 = vpack.c.b16 %v1118, %v1117
        %v1137 = vpack.c.b16 %v1120, %v1119
        %v1138 = vpack.c.b16 %v1122, %v1121
        %v1187 = vunpack.c.l.b16 %v1027
        %v1188 = vunpack.c.l.b16 %v1028
        %v1189 = vunpack.c.l.b16 %v1029
        %v1190 = vunpack.c.l.b16 %v1030
        %v1191 = vunpack.c.l.b16 %v1031
        %v1192 = vunpack.c.l.b16 %v1032
        %v1193 = vunpack.c.l.b16 %v1033
        %v1194 = vunpack.c.l.b16 %v1034
        %v1195 = vunpack.c.l.b16 %v1035
        %v1196 = vunpack.c.l.b16 %v1036
        %v1197 = vunpack.c.l.b16 %v1037
        %v1198 = vunpack.c.l.b16 %v1038
        %v1199 = vunpack.c.l.b16 %v1039
        %v1200 = vunpack.c.l.b16 %v1040
        %v1201 = vunpack.c.l.b16 %v1041
        %v1202 = vunpack.c.l.b16 %v1042
        %v1203 = vunpack.c.l.b16 %v1043
        %v1204 = vunpack.c.l.b16 %v1044
        %v1205 = vunpack.c.l.b16 %v1045
        %v1206 = vunpack.c.l.b16 %v1046
        %v1207 = vunpack.c.l.b16 %v1047
        %v1208 = vunpack.c.l.b16 %v1048
        %v1209 = vunpack.c.l.b16 %v1049
        %v1210 = vunpack.c.l.b16 %v1050
        %v1211 = vunpack.c.l.b16 %v1051
        %v1212 = vunpack.c.l.b16 %v1052
        %v1213 = vunpack.c.l.b16 %v1053
        %v1214 = vunpack.c.l.b16 %v1054
        %v1215 = vunpack.c.l.b16 %v1055
        %v1216 = vunpack.c.l.b16 %v1056
        %v1217 = vunpack.c.l.b16 %v1057
        %v1218 = vunpack.c.l.b16 %v1058
        %v1219 = vpack.c.b16 %v1188, %v1187
        %v1220 = vpack.c.b16 %v1190, %v1189
        %v1221 = vpack.c.b16 %v1192, %v1191
        %v1222 = vpack.c.b16 %v1194, %v1193
        %v1223 = vpack.c.b16 %v1196, %v1195
        %v1224 = vpack.c.b16 %v1198, %v1197
        %v1225 = vpack.c.b16 %v1200, %v1199
        %v1226 = vpack.c.b16 %v1202, %v1201
        %v1227 = vpack.c.b16 %v1204, %v1203
        %v1228 = vpack.c.b16 %v1206, %v1205
        %v1229 = vpack.c.b16 %v1208, %v1207
        %v1230 = vpack.c.b16 %v1210, %v1209
        %v1231 = vpack.c.b16 %v1212, %v1211
        %v1232 = vpack.c.b16 %v1214, %v1213
        %v1233 = vpack.c.b16 %v1216, %v1215
        %v1234 = vpack.c.b16 %v1218, %v1217
        %v1251 = vld [vmem:[#allocation10] sm:$0xf]
        %v1252 = vld [vmem:[#allocation10 + $0x4] sm:$0xf]
        %v1253 = vld [vmem:[#allocation10 + $0x8] sm:$0xf]
        %v1254 = vld [vmem:[#allocation10 + $0xc] sm:$0xf]
        %v1255 = vld [vmem:[#allocation10 + $0x10] sm:$0xf]
        %v1256 = vld [vmem:[#allocation10 + $0x14] sm:$0xf]
        %v1257 = vld [vmem:[#allocation10 + $0x18] sm:$0xf]
        %v1258 = vld [vmem:[#allocation10 + $0x1c] sm:$0xf]
        %v1259 = vld [vmem:[#allocation10 + $0x20] sm:$0xf]
        %v1260 = vld [vmem:[#allocation10 + $0x24] sm:$0xf]
        %v1261 = vld [vmem:[#allocation10 + $0x28] sm:$0xf]
        %v1262 = vld [vmem:[#allocation10 + $0x2c] sm:$0xf]
        %v1263 = vld [vmem:[#allocation10 + $0x30] sm:$0xf]
        %v1264 = vld [vmem:[#allocation10 + $0x34] sm:$0xf]
        %v1265 = vld [vmem:[#allocation10 + $0x38] sm:$0xf]
        %v1266 = vld [vmem:[#allocation10 + $0x3c] sm:$0xf]
        %v1267 = vld [vmem:[#allocation10 + $0x40] sm:$0xf]
        %v1268 = vld [vmem:[#allocation10 + $0x44] sm:$0xf]
        %v1269 = vld [vmem:[#allocation10 + $0x48] sm:$0xf]
        %v1270 = vld [vmem:[#allocation10 + $0x4c] sm:$0xf]
        %v1271 = vld [vmem:[#allocation10 + $0x50] sm:$0xf]
        %v1272 = vld [vmem:[#allocation10 + $0x54] sm:$0xf]
        %v1273 = vld [vmem:[#allocation10 + $0x58] sm:$0xf]
        %v1274 = vld [vmem:[#allocation10 + $0x5c] sm:$0xf]
        %v1275 = vld [vmem:[#allocation10 + $0x60] sm:$0xf]
        %v1276 = vld [vmem:[#allocation10 + $0x64] sm:$0xf]
        %v1277 = vld [vmem:[#allocation10 + $0x68] sm:$0xf]
        %v1278 = vld [vmem:[#allocation10 + $0x6c] sm:$0xf]
        %v1279 = vld [vmem:[#allocation10 + $0x70] sm:$0xf]
        %v1280 = vld [vmem:[#allocation10 + $0x74] sm:$0xf]
        %v1281 = vld [vmem:[#allocation10 + $0x78] sm:$0xf]
        %v1282 = vld [vmem:[#allocation10 + $0x7c] sm:$0xf]
        %v1283 = vld [vmem:[%s7] sm:$0x1]
        %v1285 = vlaneseq
        %v1286 = vshrl.u32 %v1285, 7
        %v1287 = vsub.s32 0, %v1286
        %v1288 = vrot.slane %v1283, %v1287
        %v1322 = vunpack.c.l.b16 %v1251
        %v1323 = vunpack.c.l.b16 %v1252
        %v1324 = vunpack.c.l.b16 %v1253
        %v1325 = vunpack.c.l.b16 %v1254
        %v1326 = vunpack.c.l.b16 %v1255
        %v1327 = vunpack.c.l.b16 %v1256
        %v1328 = vunpack.c.l.b16 %v1257
        %v1329 = vunpack.c.l.b16 %v1258
        %v1330 = vunpack.c.l.b16 %v1259
        %v1331 = vunpack.c.l.b16 %v1260
        %v1332 = vunpack.c.l.b16 %v1261
        %v1333 = vunpack.c.l.b16 %v1262
        %v1334 = vunpack.c.l.b16 %v1263
        %v1335 = vunpack.c.l.b16 %v1264
        %v1336 = vunpack.c.l.b16 %v1265
        %v1337 = vunpack.c.l.b16 %v1266
        %v1338 = vunpack.c.l.b16 %v1267
        %v1339 = vunpack.c.l.b16 %v1268
        %v1340 = vunpack.c.l.b16 %v1269
        %v1341 = vunpack.c.l.b16 %v1270
        %v1342 = vunpack.c.l.b16 %v1271
        %v1343 = vunpack.c.l.b16 %v1272
        %v1344 = vunpack.c.l.b16 %v1273
        %v1345 = vunpack.c.l.b16 %v1274
        %v1346 = vunpack.c.l.b16 %v1275
        %v1347 = vunpack.c.l.b16 %v1276
        %v1348 = vunpack.c.l.b16 %v1277
        %v1349 = vunpack.c.l.b16 %v1278
        %v1350 = vunpack.c.l.b16 %v1279
        %v1351 = vunpack.c.l.b16 %v1280
        %v1352 = vunpack.c.l.b16 %v1281
        %v1353 = vunpack.c.l.b16 %v1282
        %v1354 = vpack.c.b16 %v1323, %v1322
        %v1355 = vpack.c.b16 %v1325, %v1324
        %v1356 = vpack.c.b16 %v1327, %v1326
        %v1357 = vpack.c.b16 %v1329, %v1328
        %v1358 = vpack.c.b16 %v1331, %v1330
        %v1359 = vpack.c.b16 %v1333, %v1332
        %v1360 = vpack.c.b16 %v1335, %v1334
        %v1361 = vpack.c.b16 %v1337, %v1336
        %v1362 = vpack.c.b16 %v1339, %v1338
        %v1363 = vpack.c.b16 %v1341, %v1340
        %v1364 = vpack.c.b16 %v1343, %v1342
        %v1365 = vpack.c.b16 %v1345, %v1344
        %v1366 = vpack.c.b16 %v1347, %v1346
        %v1367 = vpack.c.b16 %v1349, %v1348
        %v1368 = vpack.c.b16 %v1351, %v1350
        %v1369 = vpack.c.b16 %v1353, %v1352
        %1386 = vmatprep.subr.bf16.mxu0 0
        %1387 = vmatpush1.bf16.msra.mxu0 %v1354
        %1388 = vmatprep.subr.bf16.mxu0 0
        %1389 = vmatpush1.bf16.msra.mxu0 %v1355
        %1390 = vmatprep.subr.bf16.mxu0 0
        %1391 = vmatpush1.bf16.msra.mxu0 %v1356
        %1392 = vmatprep.subr.bf16.mxu0 0
        %1393 = vmatpush1.bf16.msra.mxu0 %v1357
        %1394 = vmatprep.subr.bf16.mxu0 0
        %1395 = vmatpush1.bf16.msra.mxu0 %v1358
        %1396 = vmatprep.subr.bf16.mxu0 0
        %1397 = vmatpush1.bf16.msra.mxu0 %v1359
        %1398 = vmatprep.subr.bf16.mxu0 0
        %1399 = vmatpush1.bf16.msra.mxu0 %v1360
        %1400 = vmatprep.subr.bf16.mxu0 0
        %1401 = vmatpush1.bf16.msra.mxu0 %v1361
        %1402 = vmatprep.subr.bf16.mxu0 0
        %1403 = vmatpush1.bf16.msra.mxu0 %v1362
        %1404 = vmatprep.subr.bf16.mxu0 0
        %1405 = vmatpush1.bf16.msra.mxu0 %v1363
        %1406 = vmatprep.subr.bf16.mxu0 0
        %1407 = vmatpush1.bf16.msra.mxu0 %v1364
        %1408 = vmatprep.subr.bf16.mxu0 0
        %1409 = vmatpush1.bf16.msra.mxu0 %v1365
        %1410 = vmatprep.subr.bf16.mxu0 0
        %1411 = vmatpush1.bf16.msra.mxu0 %v1366
        %1412 = vmatprep.subr.bf16.mxu0 0
        %1413 = vmatpush1.bf16.msra.mxu0 %v1367
        %1414 = vmatprep.subr.bf16.mxu0 0
        %1415 = vmatpush1.bf16.msra.mxu0 %v1368
        %1416 = vmatprep.subr.bf16.mxu0 0
        %1417 = vmatpush1.bf16.msra.mxu0 %v1369
        %1418 = vmatprep.mubr.bf16.mxu0 %v1219
        %1419 = vmatmul.mubr.bf16.gmra.mrb[0].mxu0 %v1123
        %v1420 = vpop.f32.mrb[0].mxu0
        %v1421 = vadd.f32 %v1288, %v1420
        %v1422 = vpop.f32.mrb[0].mxu0
        %v1423 = vpop.f32.mrb[0].mxu0
        %v1424 = vadd.f32 %v1288, %v1423
        %v1425 = vpop.f32.mrb[0].mxu0
        %1426 = vmatprep.mubr.bf16.mxu0 %v1220
        %1427 = vmatmul.mubr.bf16.gmra.mrb[0].mxu0 %v1124
        %v1428 = vpop.f32.mrb[0].mxu0
        %v1429 = vadd.f32 %v1288, %v1428
        %v1430 = vpop.f32.mrb[0].mxu0
        %v1431 = vpop.f32.mrb[0].mxu0
        %v1432 = vadd.f32 %v1288, %v1431
        %v1433 = vpop.f32.mrb[0].mxu0
        %1434 = vmatprep.mubr.bf16.mxu0 %v1221
        %1435 = vmatmul.mubr.bf16.gmra.mrb[0].mxu0 %v1125
        %v1436 = vpop.f32.mrb[0].mxu0
        %v1437 = vadd.f32 %v1288, %v1436
        %v1438 = vpop.f32.mrb[0].mxu0
        %v1439 = vpop.f32.mrb[0].mxu0
        %v1440 = vadd.f32 %v1288, %v1439
        %v1441 = vpop.f32.mrb[0].mxu0
        %1442 = vmatprep.mubr.bf16.mxu0 %v1222
        %1443 = vmatmul.mubr.bf16.gmra.mrb[0].mxu0 %v1126
        %v1444 = vpop.f32.mrb[0].mxu0
        %v1445 = vadd.f32 %v1288, %v1444
        %v1446 = vpop.f32.mrb[0].mxu0
        %v1447 = vpop.f32.mrb[0].mxu0
        %v1448 = vadd.f32 %v1288, %v1447
        %v1449 = vpop.f32.mrb[0].mxu0
        %1450 = vmatprep.mubr.bf16.mxu0 %v1223
        %1451 = vmatmul.mubr.bf16.gmra.mrb[0].mxu0 %v1127
        %v1452 = vpop.f32.mrb[0].mxu0
        %v1453 = vadd.f32 %v1288, %v1452
        %v1454 = vpop.f32.mrb[0].mxu0
        %v1455 = vpop.f32.mrb[0].mxu0
        %v1456 = vadd.f32 %v1288, %v1455
        %v1457 = vpop.f32.mrb[0].mxu0
        %1458 = vmatprep.mubr.bf16.mxu0 %v1224
        %1459 = vmatmul.mubr.bf16.gmra.mrb[0].mxu0 %v1128
        %v1460 = vpop.f32.mrb[0].mxu0
        %v1461 = vadd.f32 %v1288, %v1460
        %v1462 = vpop.f32.mrb[0].mxu0
        %v1463 = vpop.f32.mrb[0].mxu0
        %v1464 = vadd.f32 %v1288, %v1463
        %v1465 = vpop.f32.mrb[0].mxu0
        %1466 = vmatprep.mubr.bf16.mxu0 %v1225
        %1467 = vmatmul.mubr.bf16.gmra.mrb[0].mxu0 %v1129
        %v1468 = vpop.f32.mrb[0].mxu0
        %v1469 = vadd.f32 %v1288, %v1468
        %v1470 = vpop.f32.mrb[0].mxu0
        %v1471 = vpop.f32.mrb[0].mxu0
        %v1472 = vadd.f32 %v1288, %v1471
        %v1473 = vpop.f32.mrb[0].mxu0
        %1474 = vmatprep.mubr.bf16.mxu0 %v1226
        %1475 = vmatmul.mubr.bf16.gmra.mrb[0].mxu0 %v1130
        %v1476 = vpop.f32.mrb[0].mxu0
        %v1477 = vadd.f32 %v1288, %v1476
        %v1478 = vpop.f32.mrb[0].mxu0
        %v1479 = vpop.f32.mrb[0].mxu0
        %v1480 = vadd.f32 %v1288, %v1479
        %v1481 = vpop.f32.mrb[0].mxu0
        %1482 = vmatprep.mubr.bf16.mxu0 %v1227
        %1483 = vmatmul.mubr.bf16.gmra.mrb[0].mxu0 %v1131
        %v1484 = vpop.f32.mrb[0].mxu0
        %v1485 = vadd.f32 %v1288, %v1484
        %v1486 = vpop.f32.mrb[0].mxu0
        %v1487 = vpop.f32.mrb[0].mxu0
        %v1488 = vadd.f32 %v1288, %v1487
        %v1489 = vpop.f32.mrb[0].mxu0
        %1490 = vmatprep.mubr.bf16.mxu0 %v1228
        %1491 = vmatmul.mubr.bf16.gmra.mrb[0].mxu0 %v1132
        %v1492 = vpop.f32.mrb[0].mxu0
        %v1493 = vadd.f32 %v1288, %v1492
        %v1494 = vpop.f32.mrb[0].mxu0
        %v1495 = vpop.f32.mrb[0].mxu0
        %v1496 = vadd.f32 %v1288, %v1495
        %v1497 = vpop.f32.mrb[0].mxu0
        %1498 = vmatprep.mubr.bf16.mxu0 %v1229
        %1499 = vmatmul.mubr.bf16.gmra.mrb[0].mxu0 %v1133
        %v1500 = vpop.f32.mrb[0].mxu0
        %v1501 = vadd.f32 %v1288, %v1500
        %v1502 = vpop.f32.mrb[0].mxu0
        %v1503 = vpop.f32.mrb[0].mxu0
        %v1504 = vadd.f32 %v1288, %v1503
        %v1505 = vpop.f32.mrb[0].mxu0
        %1506 = vmatprep.mubr.bf16.mxu0 %v1230
        %1507 = vmatmul.mubr.bf16.gmra.mrb[0].mxu0 %v1134
        %v1508 = vpop.f32.mrb[0].mxu0
        %v1509 = vadd.f32 %v1288, %v1508
        %v1510 = vpop.f32.mrb[0].mxu0
        %v1511 = vpop.f32.mrb[0].mxu0
        %v1512 = vadd.f32 %v1288, %v1511
        %v1513 = vpop.f32.mrb[0].mxu0
        %1514 = vmatprep.mubr.bf16.mxu0 %v1231
        %1515 = vmatmul.mubr.bf16.gmra.mrb[0].mxu0 %v1135
        %v1516 = vpop.f32.mrb[0].mxu0
        %v1517 = vadd.f32 %v1288, %v1516
        %v1518 = vpop.f32.mrb[0].mxu0
        %v1519 = vpop.f32.mrb[0].mxu0
        %v1520 = vadd.f32 %v1288, %v1519
        %v1521 = vpop.f32.mrb[0].mxu0
        %1522 = vmatprep.mubr.bf16.mxu0 %v1232
        %1523 = vmatmul.mubr.bf16.gmra.mrb[0].mxu0 %v1136
        %v1524 = vpop.f32.mrb[0].mxu0
        %v1525 = vadd.f32 %v1288, %v1524
        %v1526 = vpop.f32.mrb[0].mxu0
        %v1527 = vpop.f32.mrb[0].mxu0
        %v1528 = vadd.f32 %v1288, %v1527
        %v1529 = vpop.f32.mrb[0].mxu0
        %1530 = vmatprep.mubr.bf16.mxu0 %v1233
        %1531 = vmatmul.mubr.bf16.gmra.mrb[0].mxu0 %v1137
        %v1532 = vpop.f32.mrb[0].mxu0
        %v1533 = vadd.f32 %v1288, %v1532
        %v1534 = vpop.f32.mrb[0].mxu0
        %v1535 = vpop.f32.mrb[0].mxu0
        %v1536 = vadd.f32 %v1288, %v1535
        %v1537 = vpop.f32.mrb[0].mxu0
        %1538 = vmatprep.mubr.bf16.mxu0 %v1234
        %1539 = vmatmul.mubr.bf16.gmra.mrb[0].mxu0 %v1138
        %v1540 = vpop.f32.mrb[0].mxu0
        %v1541 = vadd.f32 %v1288, %v1540
        %v1542 = vpop.f32.mrb[0].mxu0
        %v1543 = vpop.f32.mrb[0].mxu0
        %v1544 = vadd.f32 %v1288, %v1543
        %v1545 = vpop.f32.mrb[0].mxu0
        %1546 = vdwg.mxu0
        %1547 = vst [vmem:[%s406] sm:$0xff] %v1421
        %1548 = vst [vmem:[%s406 + $0x8] sm:$0xff] %v1424
        %1549 = vst [vmem:[%s406 + $0x10] sm:$0xff] %v1429
        %1550 = vst [vmem:[%s406 + $0x18] sm:$0xff] %v1432
        %1551 = vst [vmem:[%s406 + $0x20] sm:$0xff] %v1437
        %1552 = vst [vmem:[%s406 + $0x28] sm:$0xff] %v1440
        %1553 = vst [vmem:[%s406 + $0x30] sm:$0xff] %v1445
        %1554 = vst [vmem:[%s406 + $0x38] sm:$0xff] %v1448
        %1555 = vst [vmem:[%s406 + $0x40] sm:$0xff] %v1453
        %1556 = vst [vmem:[%s406 + $0x48] sm:$0xff] %v1456
        %1557 = vst [vmem:[%s406 + $0x50] sm:$0xff] %v1461
        %1558 = vst [vmem:[%s406 + $0x58] sm:$0xff] %v1464
        %1559 = vst [vmem:[%s406 + $0x60] sm:$0xff] %v1469
        %1560 = vst [vmem:[%s406 + $0x68] sm:$0xff] %v1472
        %1561 = vst [vmem:[%s406 + $0x70] sm:$0xff] %v1477
        %1562 = vst [vmem:[%s406 + $0x78] sm:$0xff] %v1480
        %1563 = vst [vmem:[%s406 + $0x80] sm:$0xff] %v1485
        %1564 = vst [vmem:[%s406 + $0x88] sm:$0xff] %v1488
        %1565 = vst [vmem:[%s406 + $0x90] sm:$0xff] %v1493
        %1566 = vst [vmem:[%s406 + $0x98] sm:$0xff] %v1496
        %1567 = vst [vmem:[%s406 + $0xa0] sm:$0xff] %v1501
        %1568 = vst [vmem:[%s406 + $0xa8] sm:$0xff] %v1504
        %1569 = vst [vmem:[%s406 + $0xb0] sm:$0xff] %v1509
        %1570 = vst [vmem:[%s406 + $0xb8] sm:$0xff] %v1512
        %1571 = vst [vmem:[%s406 + $0xc0] sm:$0xff] %v1517
        %1572 = vst [vmem:[%s406 + $0xc8] sm:$0xff] %v1520
        %1573 = vst [vmem:[%s406 + $0xd0] sm:$0xff] %v1525
        %1574 = vst [vmem:[%s406 + $0xd8] sm:$0xff] %v1528
        %1575 = vst [vmem:[%s406 + $0xe0] sm:$0xff] %v1533
        %1576 = vst [vmem:[%s406 + $0xe8] sm:$0xff] %v1536
        %1577 = vst [vmem:[%s406 + $0xf0] sm:$0xff] %v1541
        %1578 = vst [vmem:[%s406 + $0xf8] sm:$0xff] %v1544
        %s1579 = sand.u32 %s215, 1
        %s1580 = scalar_lea.sflag [#allocation4], %s1579
        %s1581 = sand.u32 %s215, 1
        %s1582 = smul.addr %s1581, 256
        %s1583 = scalar_lea.vmem [#allocation11], %s1582
        // Predicated region
        $region73: #{tpu_custom_call.1} parent=51 // pred_check
          %p1584 = pneg %p225
        $region74: #{tpu_custom_call.1} parent=51 // pred_check_branch
          %1586 = sbr.rel (%p1584) target = $region76
        $region75: #{tpu_custom_call.1} parent=51 // pred_region
          %s1588 = ssub.s32 4096, 4096
          %1589 = vsyncadd %s1580, %s1588
          %s1590 = smul.addr %s29, 32
          %s1591 = smul.addr %s1590, 128
          %s1592 = scalar_lea.hbm %s8, %s1591
          %s1593 = sshll.u32 %s1583, 4
          %s1594 = int_to_ptr.vmem [resolvable:$true] %s1593
          %1599 = dma.vmem_to_hbm [thread:$0]  %s1594, 4096, %s1592, %s1580, 128, 128, 8
        $region76: #{tpu_custom_call.1} parent=51 // pred_fallthru
          _
      $region52: #{tpu_custom_call.1} parent=5 // pred_fallthru
        _
      %p1600 = scmp.le.s32.totalorder 2, %s24
      // Predicated region
      $region77: #{tpu_custom_call.1} parent=5 // pred_check
        %p1601 = pneg %p1600
      $region78: #{tpu_custom_call.1} parent=5 // pred_check_branch
        %1603 = sbr.rel (%p1601) target = $region80
      $region79: #{tpu_custom_call.1} parent=5 // pred_region
        %s1604 = ssub.s32 %s24, 2
        // Predicated region
        $region81: #{tpu_custom_call.1} parent=79 // pred_check
          %p1605 = pneg %p231
        $region82: #{tpu_custom_call.1} parent=79 // pred_check_branch
          %1607 = sbr.rel (%p1605) target = $region84
        $region83: #{tpu_custom_call.1} parent=79 // pred_region
          %s1608 = sand.u32 %s216, 1
          %s1609 = scalar_lea.sflag [#allocation4], %s1608
          %s1610 = sand.u32 %s216, 1
          %s1611 = smul.addr %s1610, 256
          %s1612 = scalar_lea.vmem [#allocation11], %s1611
          %1613 = dma.done %s1609, 4096
        $region84: #{tpu_custom_call.1} parent=79 // pred_fallthru
          _
      $region80: #{tpu_custom_call.1} parent=5 // pred_fallthru
        _
    $region6: #{tpu_custom_call.1} parent=1 // loop_footer
      %s28 = sadd.s32 1, %s24
    $region7: #{tpu_custom_call.1} parent=1 // loop_footer_branch
      %23 = sbr.rel target = $region3
    $region8: #{tpu_custom_call.1} parent=1 // loop_exit
      _
    %1614 = vsyncpa [#allocation3], 1
    %s1615 = scalar_lea.sflag [#allocation3], 1
    %1616 = vsyncpa %s1615, 1
    %1617 = vsyncpa [#allocation6], 1
    %s1618 = scalar_lea.sflag [#allocation6], 1
    %1619 = vsyncpa %s1618, 1
    %1620 = vsyncpa [#allocation9], 1
    %1621 = vsyncpa [#allocation4], 1
    %s1622 = scalar_lea.sflag [#allocation4], 1
    %1623 = vsyncpa %s1622, 1

</llo_original>
